<compile_context>
chip_gen: v7x
topology: tpu7x:2x2x1
jax: 0.10.0
libtpu: 0.0.40
codegen_flags: <defaults>
</compile_context>

<pallas_src>
import functools

import jax
import jax.numpy as jnp
from jax.experimental import pallas as pl
from jax.experimental.pallas import tpu as pltpu


# ----------------------------- Pallas kernels ------------------------------

def _conv_stats_kernel(x_ref, w_ref, o_ref, sum_ref, sq_ref, *,
                       kh_sz, oh, ow, stride):
    """One image per grid step: conv (static KH taps, K = KW*Cin) + BN partial stats.

    x_ref   : (1, H_pad, OW, KW*Cin)  bf16  W-tap-folded padded input image
    w_ref   : (KH, KW*Cin, Coutp)     bf16  resident weight (constant index_map)
    o_ref   : (1, OH*OW, Coutp)       bf16  conv output for this image
    sum_ref : (1, 8, Coutp)           f32   per-image partial channel sum
    sq_ref  : (1, 8, Coutp)           f32   per-image partial channel sum-of-squares
    """
    m = oh * ow
    kfold = w_ref.shape[1]
    coutp = o_ref.shape[-1]

    acc = jnp.zeros((m, coutp), jnp.float32)
    for kh in range(kh_sz):                 # static unroll over KH taps
        rows = pl.ds(kh, oh) if stride == 1 else pl.ds(kh, oh, stride=stride)
        lhs = x_ref[0, rows, :, :]          # (OH, OW, KW*Cin) bf16
        acc += jnp.dot(lhs.reshape(m, kfold), w_ref[kh],
                       preferred_element_type=jnp.float32)   # bf16 MXU, f32 acc

    o_ref[0] = acc.astype(o_ref.dtype)      # single store, no read-modify-write

    # Per-image partial BN statistics (reduced in the wrapper -> axis stays "parallel").
    s = jnp.sum(acc, axis=0, keepdims=True)            # (1, Coutp)
    sq = jnp.sum(acc * acc, axis=0, keepdims=True)
    sum_ref[0] = jnp.broadcast_to(s, sum_ref.shape[1:])
    sq_ref[0] = jnp.broadcast_to(sq, sq_ref.shape[1:])


def _bn_relu_kernel(y_ref, scale_ref, bias_ref, o_ref):
    # Fused affine batch-norm + ReLU (elementwise, VPU), lane-dense blocks.
    y = y_ref[...].astype(jnp.float32)
    o_ref[...] = jnp.maximum(y * scale_ref[...] + bias_ref[...], 0.0)


# ------------------------------- Wrapper ------------------------------------

@functools.partial(jax.jit, static_argnames=("stride", "padding"))
def basic_conv2d(x_nchw, conv_weight, gamma, beta, *, stride=1, padding=1,
                 eps=1e-3):
    """x_nchw: (N, Cin, H, W).  conv_weight: (Cout, Cin, KH, KW) (PyTorch layout)."""
    cout, cin, kh_sz, kw_sz = conv_weight.shape
    n, _, h, w = x_nchw.shape
    oh = (h + 2 * padding - kh_sz) // stride + 1
    ow = (w + 2 * padding - kw_sz) // stride + 1
    h_pad = h + 2 * padding
    coutp = ((cout + 127) // 128) * 128      # lane-dense channel padding
    kfold = kw_sz * cin                      # folded contraction depth
    m_img = oh * ow                          # conv rows per image (MXU M)
    m_total = n * m_img                      # BN reduction size (true M)

    # NCHW -> padded NHWC, bf16 in HBM (halves pass-1 read traffic).
    # TODO(synk): keep activations NHWC/bf16 across a layer stack to avoid the
    # per-layer NCHW<->NHWC transposes and casts.
    x_nhwc = jnp.transpose(x_nchw, (0, 2, 3, 1))
    x_sp = jnp.pad(x_nhwc, ((0, 0), (padding, padding), (padding, padding), (0, 0)))
    # Fold the KW taps into the contraction (lane) dim: (N, H_pad, OW, KW*Cin).
    taps = [x_sp[:, :, kw:kw + (ow - 1) * stride + 1:stride, :] for kw in range(kw_sz)]
    x_f = jnp.concatenate(taps, axis=-1).astype(jnp.bfloat16)

    # (Cout, Cin, KH, KW) -> (KH, KW*Cin, Coutp): kw-major/cin-minor, zero-padded, bf16.
    w_t = jnp.transpose(conv_weight, (2, 3, 1, 0)).reshape(kh_sz, kfold, cout)
    w_t = jnp.pad(w_t, ((0, 0), (0, 0), (0, coutp - cout))).astype(jnp.bfloat16)

    # ---- Pass 1: whole-image conv + per-image partial BN statistics ---------
    conv_out, part_sum, part_sq = pl.pallas_call(
        functools.partial(_conv_stats_kernel,
                          kh_sz=kh_sz, oh=oh, ow=ow, stride=stride),
        out_shape=(jax.ShapeDtypeStruct((n, m_img, coutp), jnp.bfloat16),
                   jax.ShapeDtypeStruct((n, 8, coutp), jnp.float32),
                   jax.ShapeDtypeStruct((n, 8, coutp), jnp.float32)),
        grid_spec=pltpu.PrefetchScalarGridSpec(
            num_scalar_prefetch=0,
            grid=(n,),                                       # one image per step
            in_specs=[
                pl.BlockSpec((1, h_pad, ow, kfold), lambda i: (i, 0, 0, 0)),
                pl.BlockSpec((kh_sz, kfold, coutp), lambda i: (0, 0, 0)),  # resident
            ],
            out_specs=(pl.BlockSpec((1, m_img, coutp), lambda i: (i, 0, 0)),
                       pl.BlockSpec((1, 8, coutp), lambda i: (i, 0, 0)),
                       pl.BlockSpec((1, 8, coutp), lambda i: (i, 0, 0))),
        ),
        # Per-image output + per-image partial stats -> no cross-step residency,
        # so the image axis can be "parallel" (uses both TCs on v7x).
        compiler_params=pltpu.CompilerParams(
            dimension_semantics=("parallel",),
            vmem_limit_bytes=64 * 1024 * 1024),
    )(x_f, w_t)
    # TODO(synk): for very large feature maps (OH*OW*Coutp f32 acc > ~16 MiB),
    # split OH into row blocks per step to stay inside v7x's 64 MiB VMEM.

    # Tiny per-channel glue: reduce partial stats, fold gamma/beta into scale/bias.
    ch_sum = part_sum[:, 0, :].sum(axis=0)                   # (Coutp,)
    ch_sq = part_sq[:, 0, :].sum(axis=0)
    mean = ch_sum / m_total
    var = jnp.maximum(ch_sq / m_total - mean * mean, 0.0)    # clamp cancellation
    gamma_p = jnp.pad(gamma.astype(jnp.float32), (0, coutp - cout))
    beta_p = jnp.pad(beta.astype(jnp.float32), (0, coutp - cout))
    scale = (gamma_p * jax.lax.rsqrt(var + eps)).reshape(1, coutp)
    bias = (beta_p - mean * gamma_p * jax.lax.rsqrt(var + eps)).reshape(1, coutp)

    # ---- Pass 2: fused BN-affine + ReLU (large lane-dense blocks) -----------
    y2d = conv_out.reshape(m_total, coutp)                   # free reshape
    tm = min(1024, m_total)
    y = pl.pallas_call(
        _bn_relu_kernel,
        out_shape=jax.ShapeDtypeStruct((m_total, coutp), jnp.float32),
        grid_spec=pltpu.PrefetchScalarGridSpec(
            num_scalar_prefetch=0,
            grid=(pl.cdiv(m_total, tm),),
            in_specs=[pl.BlockSpec((tm, coutp), lambda i: (i, 0)),
                      pl.BlockSpec((1, coutp), lambda i: (0, 0)),
                      pl.BlockSpec((1, coutp), lambda i: (0, 0))],
            out_specs=pl.BlockSpec((tm, coutp), lambda i: (i, 0)),
        ),
        compiler_params=pltpu.CompilerParams(
            dimension_semantics=("parallel",),
            vmem_limit_bytes=64 * 1024 * 1024),
    )(y2d, scale, bias)

    # (M, Coutp) -> (N, OH, OW, Cout) -> NCHW; drop the zero-padded channels.
    out_nhwc = y.reshape(n, oh, ow, coutp)[..., :cout]
    return jnp.transpose(out_nhwc, (0, 3, 1, 2))


# ------------------------------- Reference ----------------------------------

def _reference(x_nchw, conv_weight, gamma, beta, stride=1, padding=1, eps=1e-3):
    out = jax.lax.conv_general_dilated(
        x_nchw, conv_weight,
        window_strides=(stride, stride),
        padding=[(padding, padding), (padding, padding)],
        dimension_numbers=("NCHW", "OIHW", "NCHW"))
    mean = jnp.mean(out, axis=(0, 2, 3), keepdims=True)
    var = jnp.mean((out - mean) ** 2, axis=(0, 2, 3), keepdims=True)
    out = (out - mean) * jax.lax.rsqrt(var + eps)
    out = out * gamma.reshape(1, -1, 1, 1) + beta.reshape(1, -1, 1, 1)
    return jnp.maximum(out, 0.0)


# --------------------------------- Main --------------------------------------

if __name__ == "__main__":
    key = jax.random.PRNGKey(0)
    k_x, k_w, k_g, k_b = jax.random.split(key, 4)

    N, C_IN, H, W = 2, 4, 16, 16
    C_OUT, KH, KW = 8, 3, 3
    STRIDE, PADDING = 1, 1

    x = jax.random.normal(k_x, (N, C_IN, H, W), dtype=jnp.float32)
    conv_w = jax.random.normal(k_w, (C_OUT, C_IN, KH, KW), dtype=jnp.float32) * 0.1
    gamma = 1.0 + 0.1 * jax.random.normal(k_g, (C_OUT,), dtype=jnp.float32)
    beta = 0.1 * jax.random.normal(k_b, (C_OUT,), dtype=jnp.float32)

    out = basic_conv2d(x, conv_w, gamma, beta, stride=STRIDE, padding=PADDING)
    out = jax.block_until_ready(out)

    ref = _reference(x, conv_w, gamma, beta, STRIDE, PADDING)
    assert out.shape == ref.shape == (N, C_OUT, H, W)
    # bf16 MXU operands + bf16 conv intermediate -> relaxed tolerance vs f32 reference.
    assert jnp.allclose(out, ref, atol=3e-2, rtol=3e-2), "mismatch vs reference"

    print("KERNEL_OK")
</pallas_src>

<mosaic_0001>
module attributes {stable_mosaic.version = 11 : i64} {
  func.func @_conv_stats_kernel(%arg0: i32, %arg1: memref<1x18x16x12xbf16, #tpu.memory_space<vmem>>, %arg2: memref<3x12x128xbf16, #tpu.memory_space<vmem>>, %arg3: memref<1x256x128xbf16, #tpu.memory_space<vmem>>, %arg4: memref<1x8x128xf32, #tpu.memory_space<vmem>>, %arg5: memref<1x8x128xf32, #tpu.memory_space<vmem>>) attributes {dimension_semantics = [#tpu.dimension_semantics<parallel>], iteration_bounds = array<i64: 2>, scalar_prefetch = 0 : i64, scratch_operands = 0 : i64, tpu.core_type = #tpu.core_type<tc>, window_params = [{transform_indices = @transform_0, window_bounds = array<i64: 1, 18, 16, 12>}, {pipeline_mode = #tpu.pipeline_mode<synchronous>, transform_indices = @transform_1, window_bounds = array<i64: 3, 12, 128>}, {transform_indices = @transform_2, window_bounds = array<i64: 1, 256, 128>}, {transform_indices = @transform_3, window_bounds = array<i64: 1, 8, 128>}, {transform_indices = @transform_4, window_bounds = array<i64: 1, 8, 128>}]} {
    %cst = arith.constant 0.000000e+00 : f32
    %0 = vector.broadcast %cst : f32 to vector<256x128xf32>
    %c0 = arith.constant 0 : index
    %c0_0 = arith.constant 0 : index
    %c0_1 = arith.constant 0 : index
    %c0_2 = arith.constant 0 : index
    %1 = vector.load %arg1[%c0, %c0_0, %c0_1, %c0_2] : memref<1x18x16x12xbf16, #tpu.memory_space<vmem>>, vector<1x16x16x12xbf16>
    %2 = vector.shape_cast %1 : vector<1x16x16x12xbf16> to vector<16x16x12xbf16>
    %3 = vector.shape_cast %2 : vector<16x16x12xbf16> to vector<256x12xbf16>
    %c0_3 = arith.constant 0 : index
    %c0_4 = arith.constant 0 : index
    %c0_5 = arith.constant 0 : index
    %4 = vector.load %arg2[%c0_3, %c0_4, %c0_5] : memref<3x12x128xbf16, #tpu.memory_space<vmem>>, vector<1x12x128xbf16>
    %5 = vector.shape_cast %4 : vector<1x12x128xbf16> to vector<12x128xbf16>
    %cst_6 = arith.constant dense<0.000000e+00> : vector<256x128xf32>
    %6 = tpu.matmul %3, %5, %cst_6 {dimension_numbers = #tpu.dot_dimension_numbers<[1], [0], [0], [1], [0, 0, 1, 1], [], []>} : vector<256x12xbf16>, vector<12x128xbf16>, vector<256x128xf32> -> vector<256x128xf32>
    %7 = arith.addf %0, %6 : vector<256x128xf32>
    %c0_7 = arith.constant 0 : index
    %c1 = arith.constant 1 : index
    %c0_8 = arith.constant 0 : index
    %c0_9 = arith.constant 0 : index
    %8 = vector.load %arg1[%c0_7, %c1, %c0_8, %c0_9] : memref<1x18x16x12xbf16, #tpu.memory_space<vmem>>, vector<1x16x16x12xbf16>
    %9 = vector.shape_cast %8 : vector<1x16x16x12xbf16> to vector<16x16x12xbf16>
    %10 = vector.shape_cast %9 : vector<16x16x12xbf16> to vector<256x12xbf16>
    %c1_10 = arith.constant 1 : index
    %c0_11 = arith.constant 0 : index
    %c0_12 = arith.constant 0 : index
    %11 = vector.load %arg2[%c1_10, %c0_11, %c0_12] : memref<3x12x128xbf16, #tpu.memory_space<vmem>>, vector<1x12x128xbf16>
    %12 = vector.shape_cast %11 : vector<1x12x128xbf16> to vector<12x128xbf16>
    %cst_13 = arith.constant dense<0.000000e+00> : vector<256x128xf32>
    %13 = tpu.matmul %10, %12, %cst_13 {dimension_numbers = #tpu.dot_dimension_numbers<[1], [0], [0], [1], [0, 0, 1, 1], [], []>} : vector<256x12xbf16>, vector<12x128xbf16>, vector<256x128xf32> -> vector<256x128xf32>
    %14 = arith.addf %7, %13 : vector<256x128xf32>
    %c0_14 = arith.constant 0 : index
    %c2 = arith.constant 2 : index
    %c0_15 = arith.constant 0 : index
    %c0_16 = arith.constant 0 : index
    %15 = vector.load %arg1[%c0_14, %c2, %c0_15, %c0_16] : memref<1x18x16x12xbf16, #tpu.memory_space<vmem>>, vector<1x16x16x12xbf16>
    %16 = vector.shape_cast %15 : vector<1x16x16x12xbf16> to vector<16x16x12xbf16>
    %17 = vector.shape_cast %16 : vector<16x16x12xbf16> to vector<256x12xbf16>
    %c2_17 = arith.constant 2 : index
    %c0_18 = arith.constant 0 : index
    %c0_19 = arith.constant 0 : index
    %18 = vector.load %arg2[%c2_17, %c0_18, %c0_19] : memref<3x12x128xbf16, #tpu.memory_space<vmem>>, vector<1x12x128xbf16>
    %19 = vector.shape_cast %18 : vector<1x12x128xbf16> to vector<12x128xbf16>
    %cst_20 = arith.constant dense<0.000000e+00> : vector<256x128xf32>
    %20 = tpu.matmul %17, %19, %cst_20 {dimension_numbers = #tpu.dot_dimension_numbers<[1], [0], [0], [1], [0, 0, 1, 1], [], []>} : vector<256x12xbf16>, vector<12x128xbf16>, vector<256x128xf32> -> vector<256x128xf32>
    %21 = arith.addf %14, %20 : vector<256x128xf32>
    %22 = arith.truncf %21 : vector<256x128xf32> to vector<256x128xbf16>
    %c0_21 = arith.constant 0 : index
    %c0_22 = arith.constant 0 : index
    %c0_23 = arith.constant 0 : index
    %23 = vector.load %arg3[%c0_21, %c0_22, %c0_23] : memref<1x256x128xbf16, #tpu.memory_space<vmem>>, vector<1x256x128xbf16>
    %24 = vector.shape_cast %23 : vector<1x256x128xbf16> to vector<256x128xbf16>
    %25 = vector.shape_cast %22 : vector<256x128xbf16> to vector<1x256x128xbf16>
    tpu.vector_store %arg3[%c0_21, %c0_22, %c0_23], %25 {strides = array<i32>} : memref<1x256x128xbf16, #tpu.memory_space<vmem>>, vector<1x256x128xbf16>,
    %cst_24 = arith.constant dense<0.000000e+00> : vector<128xf32>
    %26 = vector.multi_reduction <add>, %21, %cst_24 [0] : vector<256x128xf32> to vector<128xf32>
    %27 = vector.shape_cast %26 : vector<128xf32> to vector<1x128xf32>
    %28 = arith.mulf %21, %21 : vector<256x128xf32>
    %cst_25 = arith.constant dense<0.000000e+00> : vector<128xf32>
    %29 = vector.multi_reduction <add>, %28, %cst_25 [0] : vector<256x128xf32> to vector<128xf32>
    %30 = vector.shape_cast %29 : vector<128xf32> to vector<1x128xf32>
    %31 = vector.shape_cast %27 : vector<1x128xf32> to vector<1x128xf32>
    %32 = vector.broadcast %31 : vector<1x128xf32> to vector<8x128xf32>
    %c0_26 = arith.constant 0 : index
    %c0_27 = arith.constant 0 : index
    %c0_28 = arith.constant 0 : index
    %33 = vector.load %arg4[%c0_26, %c0_27, %c0_28] : memref<1x8x128xf32, #tpu.memory_space<vmem>>, vector<1x8x128xf32>
    %34 = vector.shape_cast %33 : vector<1x8x128xf32> to vector<8x128xf32>
    %35 = vector.shape_cast %32 : vector<8x128xf32> to vector<1x8x128xf32>
    tpu.vector_store %arg4[%c0_26, %c0_27, %c0_28], %35 {strides = array<i32>} : memref<1x8x128xf32, #tpu.memory_space<vmem>>, vector<1x8x128xf32>,
    %36 = vector.shape_cast %30 : vector<1x128xf32> to vector<1x128xf32>
    %37 = vector.broadcast %36 : vector<1x128xf32> to vector<8x128xf32>
    %c0_29 = arith.constant 0 : index
    %c0_30 = arith.constant 0 : index
    %c0_31 = arith.constant 0 : index
    %38 = vector.load %arg5[%c0_29, %c0_30, %c0_31] : memref<1x8x128xf32, #tpu.memory_space<vmem>>, vector<1x8x128xf32>
    %39 = vector.shape_cast %38 : vector<1x8x128xf32> to vector<8x128xf32>
    %40 = vector.shape_cast %37 : vector<8x128xf32> to vector<1x8x128xf32>
    tpu.vector_store %arg5[%c0_29, %c0_30, %c0_31], %40 {strides = array<i32>} : memref<1x8x128xf32, #tpu.memory_space<vmem>>, vector<1x8x128xf32>,
    return
  }
  func.func @transform_0(%arg0: i32) -> (i32, i32, i32, i32) {
    %c0_i32 = arith.constant 0 : i32
    %c0_i32_0 = arith.constant 0 : i32
    %c0_i32_1 = arith.constant 0 : i32
    %c0_i32_2 = arith.constant 0 : i32
    return %arg0, %c0_i32, %c0_i32_0, %c0_i32_1 : i32, i32, i32, i32
  }
  func.func @transform_1(%arg0: i32) -> (i32, i32, i32) {
    %c0_i32 = arith.constant 0 : i32
    %c0_i32_0 = arith.constant 0 : i32
    %c0_i32_1 = arith.constant 0 : i32
    %c0_i32_2 = arith.constant 0 : i32
    return %c0_i32, %c0_i32_0, %c0_i32_1 : i32, i32, i32
  }
  func.func @transform_2(%arg0: i32) -> (i32, i32, i32) {
    %c0_i32 = arith.constant 0 : i32
    %c0_i32_0 = arith.constant 0 : i32
    %c0_i32_1 = arith.constant 0 : i32
    return %arg0, %c0_i32, %c0_i32_0 : i32, i32, i32
  }
  func.func @transform_3(%arg0: i32) -> (i32, i32, i32) {
    %c0_i32 = arith.constant 0 : i32
    %c0_i32_0 = arith.constant 0 : i32
    %c0_i32_1 = arith.constant 0 : i32
    return %arg0, %c0_i32, %c0_i32_0 : i32, i32, i32
  }
  func.func @transform_4(%arg0: i32) -> (i32, i32, i32) {
    %c0_i32 = arith.constant 0 : i32
    %c0_i32_0 = arith.constant 0 : i32
    %c0_i32_1 = arith.constant 0 : i32
    return %arg0, %c0_i32, %c0_i32_0 : i32, i32, i32
  }
}

module attributes {stable_mosaic.version = 11 : i64} {
  func.func @_bn_relu_kernel(%arg0: i32, %arg1: memref<512x128xbf16, #tpu.memory_space<vmem>>, %arg2: memref<1x128xf32, #tpu.memory_space<vmem>>, %arg3: memref<1x128xf32, #tpu.memory_space<vmem>>, %arg4: memref<512x128xf32, #tpu.memory_space<vmem>>) attributes {dimension_semantics = [#tpu.dimension_semantics<parallel>], iteration_bounds = array<i64: 1>, scalar_prefetch = 0 : i64, scratch_operands = 0 : i64, tpu.core_type = #tpu.core_type<tc>, window_params = [{transform_indices = @transform_0, window_bounds = array<i64: 512, 128>}, {pipeline_mode = #tpu.pipeline_mode<synchronous>, transform_indices = @transform_1, window_bounds = array<i64: 1, 128>}, {pipeline_mode = #tpu.pipeline_mode<synchronous>, transform_indices = @transform_2, window_bounds = array<i64: 1, 128>}, {transform_indices = @transform_3, window_bounds = array<i64: 512, 128>}]} {
    %c0 = arith.constant 0 : index
    %c0_0 = arith.constant 0 : index
    %0 = vector.load %arg1[%c0, %c0_0] : memref<512x128xbf16, #tpu.memory_space<vmem>>, vector<512x128xbf16>
    %1 = arith.extf %0 : vector<512x128xbf16> to vector<512x128xf32>
    %c0_1 = arith.constant 0 : index
    %c0_2 = arith.constant 0 : index
    %2 = vector.load %arg2[%c0_1, %c0_2] : memref<1x128xf32, #tpu.memory_space<vmem>>, vector<1x128xf32>
    %3 = vector.broadcast %2 : vector<1x128xf32> to vector<512x128xf32>
    %4 = arith.mulf %1, %3 : vector<512x128xf32>
    %c0_3 = arith.constant 0 : index
    %c0_4 = arith.constant 0 : index
    %5 = vector.load %arg3[%c0_3, %c0_4] : memref<1x128xf32, #tpu.memory_space<vmem>>, vector<1x128xf32>
    %6 = vector.broadcast %5 : vector<1x128xf32> to vector<512x128xf32>
    %7 = arith.addf %4, %6 : vector<512x128xf32>
    %cst = arith.constant 0.000000e+00 : f32
    %8 = vector.broadcast %cst : f32 to vector<512x128xf32>
    %9 = arith.maximumf %7, %8 : vector<512x128xf32>
    %c0_5 = arith.constant 0 : index
    %c0_6 = arith.constant 0 : index
    %10 = vector.load %arg4[%c0_5, %c0_6] : memref<512x128xf32, #tpu.memory_space<vmem>>, vector<512x128xf32>
    tpu.vector_store %arg4[%c0_5, %c0_6], %9 {strides = array<i32>} : memref<512x128xf32, #tpu.memory_space<vmem>>, vector<512x128xf32>,
    return
  }
  func.func @transform_0(%arg0: i32) -> (i32, i32) {
    %c0_i32 = arith.constant 0 : i32
    %c0_i32_0 = arith.constant 0 : i32
    return %arg0, %c0_i32 : i32, i32
  }
  func.func @transform_1(%arg0: i32) -> (i32, i32) {
    %c0_i32 = arith.constant 0 : i32
    %c0_i32_0 = arith.constant 0 : i32
    %c0_i32_1 = arith.constant 0 : i32
    return %c0_i32, %c0_i32_0 : i32, i32
  }
  func.func @transform_2(%arg0: i32) -> (i32, i32) {
    %c0_i32 = arith.constant 0 : i32
    %c0_i32_0 = arith.constant 0 : i32
    %c0_i32_1 = arith.constant 0 : i32
    return %c0_i32, %c0_i32_0 : i32, i32
  }
  func.func @transform_3(%arg0: i32) -> (i32, i32) {
    %c0_i32 = arith.constant 0 : i32
    %c0_i32_0 = arith.constant 0 : i32
    return %arg0, %c0_i32 : i32, i32
  }
}

</mosaic_0001>

<llo_original>
// kernel: basic_conv2d.3
$region0: #{basic_conv2d.3}
  #allocation0 [shape = 'u32[]', space=smem, size = 0x4, offset = 0x4, fixed_abs, tag = 'smem constant byte address 0x4 - core index']
  #allocation1 [shape = 'u32[144,128]{1,0:T(1,128)}', space=vmem, size = 0x12000, scoped, tag = 'internal scratch']
  %s0 = inlined_call_operand.hbm [shape: bf16[512,128], index: 0, kind: input, shape index: {}]
  %s1 = inlined_call_operand.hbm [shape: f32[1,128], index: 1, kind: input, shape index: {}]
  %s2 = inlined_call_operand.hbm [shape: f32[1,128], index: 2, kind: input, shape index: {}]
  %s3 = inlined_call_operand.hbm [shape: f32[512,128], index: 3, kind: output, shape index: {}]
  %s4 = sld [smem:[#allocation0]]
  $region34: #{basic_conv2d.3} parent=0
    _
  %s6 = ssub.s32 1, %s4
  %s7 = scalar_select 0, %s6, %s4
  $region1: #{basic_conv2d.3} parent=0
    #allocation2 [shape = 'u8[131072]{0}', space=vmem, size = 0x20000, scoped, tag = 'input window, operand 0, single buffered']
    #allocation3 [shape = 's32[1]{0}', space=sflag, size = 0x4, scoped, tag = 'scoped memory for basic_conv2d.3']
    #allocation4 [shape = 's32[1]{0}', space=sflag, size = 0x4, scoped, tag = 'scoped memory for basic_conv2d.3']
    #allocation5 [shape = 'u8[512]{0}', space=vmem, size = 0x400, scoped, tag = 'input window, operand 1, single buffered']
    #allocation6 [shape = 's32[1]{0}', space=sflag, size = 0x4, scoped, tag = 'scoped memory for basic_conv2d.3']
    #allocation7 [shape = 'u8[512]{0}', space=vmem, size = 0x400, scoped, tag = 'input window, operand 2, single buffered']
    #allocation8 [shape = 'u8[262144]{0}', space=vmem, size = 0x40000, scoped, tag = 'output window, operand 0, single buffered']
    %8 = vsyncpa [#allocation3], 0
    %9 = vsyncpa [#allocation6], 0
    %10 = vsyncpa [#allocation4], 0
    // Predicated region
    $region2: #{basic_conv2d.3} parent=1 // pred_check
      _
    $region3: #{basic_conv2d.3} parent=1 // pred_check_branch
      %12 = sbr.rel (0) target = $region5
    $region4: #{basic_conv2d.3} parent=1 // pred_region
      %s14 = ssub.s32 4096, 4096
      %15 = vsyncadd [#allocation3], %s14
      %s16 = sshll.u32 [#allocation2], 4
      %s17 = int_to_ptr.vmem [resolvable:$true] %s16
      %22 = dma.hbm_to_vmem [thread:$0]  %s0, 4096, %s17, [#allocation3], 64, 64, 4
    $region5: #{basic_conv2d.3} parent=1 // pred_fallthru
      _
    // Predicated region
    $region6: #{basic_conv2d.3} parent=1 // pred_check
      _
    $region7: #{basic_conv2d.3} parent=1 // pred_check_branch
      %24 = sbr.rel (0) target = $region9
    $region8: #{basic_conv2d.3} parent=1 // pred_region
      %s26 = ssub.s32 16, 16
      %27 = vsyncadd [#allocation6], %s26
      %s29 = sshll.u32 [#allocation5], 4
      %s30 = int_to_ptr.vmem [resolvable:$true] %s29
      %32 = dma.hbm_to_vmem [thread:$0]  %s1, 16, %s30, [#allocation6]
    $region9: #{basic_conv2d.3} parent=1 // pred_fallthru
      _
    // Predicated region
    $region10: #{basic_conv2d.3} parent=1 // pred_check
      _
    $region11: #{basic_conv2d.3} parent=1 // pred_check_branch
      %34 = sbr.rel (0) target = $region13
    $region12: #{basic_conv2d.3} parent=1 // pred_region
      %s36 = ssub.s32 16, 16
      %37 = vsyncadd [#allocation6], %s36
      %s39 = sshll.u32 [#allocation7], 4
      %s40 = int_to_ptr.vmem [resolvable:$true] %s39
      %42 = dma.hbm_to_vmem [thread:$0]  %s2, 16, %s40, [#allocation6]
    $region13: #{basic_conv2d.3} parent=1 // pred_fallthru
      _
    // Predicated region
    $region14: #{basic_conv2d.3} parent=1 // pred_check
      _
    $region15: #{basic_conv2d.3} parent=1 // pred_check_branch
      %44 = sbr.rel (0) target = $region17
    $region16: #{basic_conv2d.3} parent=1 // pred_region
      %45 = dma.done [#allocation3], 4096
    $region17: #{basic_conv2d.3} parent=1 // pred_fallthru
      _
    // Predicated region
    $region18: #{basic_conv2d.3} parent=1 // pred_check
      _
    $region19: #{basic_conv2d.3} parent=1 // pred_check_branch
      %47 = sbr.rel (0) target = $region21
    $region20: #{basic_conv2d.3} parent=1 // pred_region
      %48 = dma.done [#allocation6], 16
    $region21: #{basic_conv2d.3} parent=1 // pred_fallthru
      _
    // Predicated region
    $region22: #{basic_conv2d.3} parent=1 // pred_check
      _
    $region23: #{basic_conv2d.3} parent=1 // pred_check_branch
      %50 = sbr.rel (0) target = $region25
    $region24: #{basic_conv2d.3} parent=1 // pred_region
      %51 = dma.done [#allocation6], 16
    $region25: #{basic_conv2d.3} parent=1 // pred_fallthru
      _
    %v52 = vld [vmem:[#allocation2] sm:$0xf]
    %v53 = vld [vmem:[#allocation2 + $0x4] sm:$0xf]
    %v54 = vld [vmem:[#allocation2 + $0x8] sm:$0xf]
    %v55 = vld [vmem:[#allocation2 + $0xc] sm:$0xf]
    %v56 = vld [vmem:[#allocation2 + $0x10] sm:$0xf]
    %v57 = vld [vmem:[#allocation2 + $0x14] sm:$0xf]
    %v58 = vld [vmem:[#allocation2 + $0x18] sm:$0xf]
    %v59 = vld [vmem:[#allocation2 + $0x1c] sm:$0xf]
    %v60 = vld [vmem:[#allocation2 + $0x20] sm:$0xf]
    %v61 = vld [vmem:[#allocation2 + $0x24] sm:$0xf]
    %v62 = vld [vmem:[#allocation2 + $0x28] sm:$0xf]
    %v63 = vld [vmem:[#allocation2 + $0x2c] sm:$0xf]
    %v64 = vld [vmem:[#allocation2 + $0x30] sm:$0xf]
    %v65 = vld [vmem:[#allocation2 + $0x34] sm:$0xf]
    %v66 = vld [vmem:[#allocation2 + $0x38] sm:$0xf]
    %v67 = vld [vmem:[#allocation2 + $0x3c] sm:$0xf]
    %v68 = vld [vmem:[#allocation2 + $0x40] sm:$0xf]
    %v69 = vld [vmem:[#allocation2 + $0x44] sm:$0xf]
    %v70 = vld [vmem:[#allocation2 + $0x48] sm:$0xf]
    %v71 = vld [vmem:[#allocation2 + $0x4c] sm:$0xf]
    %v72 = vld [vmem:[#allocation2 + $0x50] sm:$0xf]
    %v73 = vld [vmem:[#allocation2 + $0x54] sm:$0xf]
    %v74 = vld [vmem:[#allocation2 + $0x58] sm:$0xf]
    %v75 = vld [vmem:[#allocation2 + $0x5c] sm:$0xf]
    %v76 = vld [vmem:[#allocation2 + $0x60] sm:$0xf]
    %v77 = vld [vmem:[#allocation2 + $0x64] sm:$0xf]
    %v78 = vld [vmem:[#allocation2 + $0x68] sm:$0xf]
    %v79 = vld [vmem:[#allocation2 + $0x6c] sm:$0xf]
    %v80 = vld [vmem:[#allocation2 + $0x70] sm:$0xf]
    %v81 = vld [vmem:[#allocation2 + $0x74] sm:$0xf]
    %v82 = vld [vmem:[#allocation2 + $0x78] sm:$0xf]
    %v83 = vld [vmem:[#allocation2 + $0x7c] sm:$0xf]
    %v84 = vld [vmem:[#allocation2 + $0x80] sm:$0xf]
    %v85 = vld [vmem:[#allocation2 + $0x84] sm:$0xf]
    %v86 = vld [vmem:[#allocation2 + $0x88] sm:$0xf]
    %v87 = vld [vmem:[#allocation2 + $0x8c] sm:$0xf]
    %v88 = vld [vmem:[#allocation2 + $0x90] sm:$0xf]
    %v89 = vld [vmem:[#allocation2 + $0x94] sm:$0xf]
    %v90 = vld [vmem:[#allocation2 + $0x98] sm:$0xf]
    %v91 = vld [vmem:[#allocation2 + $0x9c] sm:$0xf]
    %v92 = vld [vmem:[#allocation2 + $0xa0] sm:$0xf]
    %v93 = vld [vmem:[#allocation2 + $0xa4] sm:$0xf]
    %v94 = vld [vmem:[#allocation2 + $0xa8] sm:$0xf]
    %v95 = vld [vmem:[#allocation2 + $0xac] sm:$0xf]
    %v96 = vld [vmem:[#allocation2 + $0xb0] sm:$0xf]
    %v97 = vld [vmem:[#allocation2 + $0xb4] sm:$0xf]
    %v98 = vld [vmem:[#allocation2 + $0xb8] sm:$0xf]
    %v99 = vld [vmem:[#allocation2 + $0xbc] sm:$0xf]
    %v100 = vld [vmem:[#allocation2 + $0xc0] sm:$0xf]
    %v101 = vld [vmem:[#allocation2 + $0xc4] sm:$0xf]
    %v102 = vld [vmem:[#allocation2 + $0xc8] sm:$0xf]
    %v103 = vld [vmem:[#allocation2 + $0xcc] sm:$0xf]
    %v104 = vld [vmem:[#allocation2 + $0xd0] sm:$0xf]
    %v105 = vld [vmem:[#allocation2 + $0xd4] sm:$0xf]
    %v106 = vld [vmem:[#allocation2 + $0xd8] sm:$0xf]
    %v107 = vld [vmem:[#allocation2 + $0xdc] sm:$0xf]
    %v108 = vld [vmem:[#allocation2 + $0xe0] sm:$0xf]
    %v109 = vld [vmem:[#allocation2 + $0xe4] sm:$0xf]
    %v110 = vld [vmem:[#allocation2 + $0xe8] sm:$0xf]
    %v111 = vld [vmem:[#allocation2 + $0xec] sm:$0xf]
    %v112 = vld [vmem:[#allocation2 + $0xf0] sm:$0xf]
    %v113 = vld [vmem:[#allocation2 + $0xf4] sm:$0xf]
    %v114 = vld [vmem:[#allocation2 + $0xf8] sm:$0xf]
    %v115 = vld [vmem:[#allocation2 + $0xfc] sm:$0xf]
    %v116 = vunpack.c.l.bf16 %v52
    %v117 = vunpack.c.l.bf16 %v53
    %v118 = vunpack.c.l.bf16 %v54
    %v119 = vunpack.c.l.bf16 %v55
    %v120 = vunpack.c.l.bf16 %v56
    %v121 = vunpack.c.l.bf16 %v57
    %v122 = vunpack.c.l.bf16 %v58
    %v123 = vunpack.c.l.bf16 %v59
    %v124 = vunpack.c.l.bf16 %v60
    %v125 = vunpack.c.l.bf16 %v61
    %v126 = vunpack.c.l.bf16 %v62
    %v127 = vunpack.c.l.bf16 %v63
    %v128 = vunpack.c.l.bf16 %v64
    %v129 = vunpack.c.l.bf16 %v65
    %v130 = vunpack.c.l.bf16 %v66
    %v131 = vunpack.c.l.bf16 %v67
    %v132 = vunpack.c.l.bf16 %v68
    %v133 = vunpack.c.l.bf16 %v69
    %v134 = vunpack.c.l.bf16 %v70
    %v135 = vunpack.c.l.bf16 %v71
    %v136 = vunpack.c.l.bf16 %v72
    %v137 = vunpack.c.l.bf16 %v73
    %v138 = vunpack.c.l.bf16 %v74
    %v139 = vunpack.c.l.bf16 %v75
    %v140 = vunpack.c.l.bf16 %v76
    %v141 = vunpack.c.l.bf16 %v77
    %v142 = vunpack.c.l.bf16 %v78
    %v143 = vunpack.c.l.bf16 %v79
    %v144 = vunpack.c.l.bf16 %v80
    %v145 = vunpack.c.l.bf16 %v81
    %v146 = vunpack.c.l.bf16 %v82
    %v147 = vunpack.c.l.bf16 %v83
    %v148 = vunpack.c.l.bf16 %v84
    %v149 = vunpack.c.l.bf16 %v85
    %v150 = vunpack.c.l.bf16 %v86
    %v151 = vunpack.c.l.bf16 %v87
    %v152 = vunpack.c.l.bf16 %v88
    %v153 = vunpack.c.l.bf16 %v89
    %v154 = vunpack.c.l.bf16 %v90
    %v155 = vunpack.c.l.bf16 %v91
    %v156 = vunpack.c.l.bf16 %v92
    %v157 = vunpack.c.l.bf16 %v93
    %v158 = vunpack.c.l.bf16 %v94
    %v159 = vunpack.c.l.bf16 %v95
    %v160 = vunpack.c.l.bf16 %v96
    %v161 = vunpack.c.l.bf16 %v97
    %v162 = vunpack.c.l.bf16 %v98
    %v163 = vunpack.c.l.bf16 %v99
    %v164 = vunpack.c.l.bf16 %v100
    %v165 = vunpack.c.l.bf16 %v101
    %v166 = vunpack.c.l.bf16 %v102
    %v167 = vunpack.c.l.bf16 %v103
    %v168 = vunpack.c.l.bf16 %v104
    %v169 = vunpack.c.l.bf16 %v105
    %v170 = vunpack.c.l.bf16 %v106
    %v171 = vunpack.c.l.bf16 %v107
    %v172 = vunpack.c.l.bf16 %v108
    %v173 = vunpack.c.l.bf16 %v109
    %v174 = vunpack.c.l.bf16 %v110
    %v175 = vunpack.c.l.bf16 %v111
    %v176 = vunpack.c.l.bf16 %v112
    %v177 = vunpack.c.l.bf16 %v113
    %v178 = vunpack.c.l.bf16 %v114
    %v179 = vunpack.c.l.bf16 %v115
    %v180 = vld [vmem:[#allocation5] sm:$0x1]
    %v182 = vlaneseq
    %v183 = vshrl.u32 %v182, 7
    %v184 = vsub.s32 0, %v183
    %v185 = vrot.slane %v180, %v184
    %v187 = vmul.f32 %v116, %v185
    %v188 = vmul.f32 %v117, %v185
    %v189 = vmul.f32 %v118, %v185
    %v190 = vmul.f32 %v119, %v185
    %v191 = vmul.f32 %v120, %v185
    %v192 = vmul.f32 %v121, %v185
    %v193 = vmul.f32 %v122, %v185
    %v194 = vmul.f32 %v123, %v185
    %v195 = vmul.f32 %v124, %v185
    %v196 = vmul.f32 %v125, %v185
    %v197 = vmul.f32 %v126, %v185
    %v198 = vmul.f32 %v127, %v185
    %v199 = vmul.f32 %v128, %v185
    %v200 = vmul.f32 %v129, %v185
    %v201 = vmul.f32 %v130, %v185
    %v202 = vmul.f32 %v131, %v185
    %v203 = vmul.f32 %v132, %v185
    %v204 = vmul.f32 %v133, %v185
    %v205 = vmul.f32 %v134, %v185
    %v206 = vmul.f32 %v135, %v185
    %v207 = vmul.f32 %v136, %v185
    %v208 = vmul.f32 %v137, %v185
    %v209 = vmul.f32 %v138, %v185
    %v210 = vmul.f32 %v139, %v185
    %v211 = vmul.f32 %v140, %v185
    %v212 = vmul.f32 %v141, %v185
    %v213 = vmul.f32 %v142, %v185
    %v214 = vmul.f32 %v143, %v185
    %v215 = vmul.f32 %v144, %v185
    %v216 = vmul.f32 %v145, %v185
    %v217 = vmul.f32 %v146, %v185
    %v218 = vmul.f32 %v147, %v185
    %v219 = vmul.f32 %v148, %v185
    %v220 = vmul.f32 %v149, %v185
    %v221 = vmul.f32 %v150, %v185
    %v222 = vmul.f32 %v151, %v185
    %v223 = vmul.f32 %v152, %v185
    %v224 = vmul.f32 %v153, %v185
    %v225 = vmul.f32 %v154, %v185
    %v226 = vmul.f32 %v155, %v185
    %v227 = vmul.f32 %v156, %v185
    %v228 = vmul.f32 %v157, %v185
    %v229 = vmul.f32 %v158, %v185
    %v230 = vmul.f32 %v159, %v185
    %v231 = vmul.f32 %v160, %v185
    %v232 = vmul.f32 %v161, %v185
    %v233 = vmul.f32 %v162, %v185
    %v234 = vmul.f32 %v163, %v185
    %v235 = vmul.f32 %v164, %v185
    %v236 = vmul.f32 %v165, %v185
    %v237 = vmul.f32 %v166, %v185
    %v238 = vmul.f32 %v167, %v185
    %v239 = vmul.f32 %v168, %v185
    %v240 = vmul.f32 %v169, %v185
    %v241 = vmul.f32 %v170, %v185
    %v242 = vmul.f32 %v171, %v185
    %v243 = vmul.f32 %v172, %v185
    %v244 = vmul.f32 %v173, %v185
    %v245 = vmul.f32 %v174, %v185
    %v246 = vmul.f32 %v175, %v185
    %v247 = vmul.f32 %v176, %v185
    %v248 = vmul.f32 %v177, %v185
    %v249 = vmul.f32 %v178, %v185
    %v250 = vmul.f32 %v179, %v185
    %v251 = vld [vmem:[#allocation7] sm:$0x1]
    %v253 = vlaneseq
    %v254 = vshrl.u32 %v253, 7
    %v255 = vsub.s32 0, %v254
    %v256 = vrot.slane %v251, %v255
    %v258 = vadd.f32 %v187, %v256
    %v259 = vadd.f32 %v188, %v256
    %v260 = vadd.f32 %v189, %v256
    %v261 = vadd.f32 %v190, %v256
    %v262 = vadd.f32 %v191, %v256
    %v263 = vadd.f32 %v192, %v256
    %v264 = vadd.f32 %v193, %v256
    %v265 = vadd.f32 %v194, %v256
    %v266 = vadd.f32 %v195, %v256
    %v267 = vadd.f32 %v196, %v256
    %v268 = vadd.f32 %v197, %v256
    %v269 = vadd.f32 %v198, %v256
    %v270 = vadd.f32 %v199, %v256
    %v271 = vadd.f32 %v200, %v256
    %v272 = vadd.f32 %v201, %v256
    %v273 = vadd.f32 %v202, %v256
    %v274 = vadd.f32 %v203, %v256
    %v275 = vadd.f32 %v204, %v256
    %v276 = vadd.f32 %v205, %v256
    %v277 = vadd.f32 %v206, %v256
    %v278 = vadd.f32 %v207, %v256
    %v279 = vadd.f32 %v208, %v256
    %v280 = vadd.f32 %v209, %v256
    %v281 = vadd.f32 %v210, %v256
    %v282 = vadd.f32 %v211, %v256
    %v283 = vadd.f32 %v212, %v256
    %v284 = vadd.f32 %v213, %v256
    %v285 = vadd.f32 %v214, %v256
    %v286 = vadd.f32 %v215, %v256
    %v287 = vadd.f32 %v216, %v256
    %v288 = vadd.f32 %v217, %v256
    %v289 = vadd.f32 %v218, %v256
    %v290 = vadd.f32 %v219, %v256
    %v291 = vadd.f32 %v220, %v256
    %v292 = vadd.f32 %v221, %v256
    %v293 = vadd.f32 %v222, %v256
    %v294 = vadd.f32 %v223, %v256
    %v295 = vadd.f32 %v224, %v256
    %v296 = vadd.f32 %v225, %v256
    %v297 = vadd.f32 %v226, %v256
    %v298 = vadd.f32 %v227, %v256
    %v299 = vadd.f32 %v228, %v256
    %v300 = vadd.f32 %v229, %v256
    %v301 = vadd.f32 %v230, %v256
    %v302 = vadd.f32 %v231, %v256
    %v303 = vadd.f32 %v232, %v256
    %v304 = vadd.f32 %v233, %v256
    %v305 = vadd.f32 %v234, %v256
    %v306 = vadd.f32 %v235, %v256
    %v307 = vadd.f32 %v236, %v256
    %v308 = vadd.f32 %v237, %v256
    %v309 = vadd.f32 %v238, %v256
    %v310 = vadd.f32 %v239, %v256
    %v311 = vadd.f32 %v240, %v256
    %v312 = vadd.f32 %v241, %v256
    %v313 = vadd.f32 %v242, %v256
    %v314 = vadd.f32 %v243, %v256
    %v315 = vadd.f32 %v244, %v256
    %v316 = vadd.f32 %v245, %v256
    %v317 = vadd.f32 %v246, %v256
    %v318 = vadd.f32 %v247, %v256
    %v319 = vadd.f32 %v248, %v256
    %v320 = vadd.f32 %v249, %v256
    %v321 = vadd.f32 %v250, %v256
    %v322 = vmax.f32 %v258, 0.0
    %v323 = vmax.f32 %v259, 0.0
    %v324 = vmax.f32 %v260, 0.0
    %v325 = vmax.f32 %v261, 0.0
    %v326 = vmax.f32 %v262, 0.0
    %v327 = vmax.f32 %v263, 0.0
    %v328 = vmax.f32 %v264, 0.0
    %v329 = vmax.f32 %v265, 0.0
    %v330 = vmax.f32 %v266, 0.0
    %v331 = vmax.f32 %v267, 0.0
    %v332 = vmax.f32 %v268, 0.0
    %v333 = vmax.f32 %v269, 0.0
    %v334 = vmax.f32 %v270, 0.0
    %v335 = vmax.f32 %v271, 0.0
    %v336 = vmax.f32 %v272, 0.0
    %v337 = vmax.f32 %v273, 0.0
    %v338 = vmax.f32 %v274, 0.0
    %v339 = vmax.f32 %v275, 0.0
    %v340 = vmax.f32 %v276, 0.0
    %v341 = vmax.f32 %v277, 0.0
    %v342 = vmax.f32 %v278, 0.0
    %v343 = vmax.f32 %v279, 0.0
    %v344 = vmax.f32 %v280, 0.0
    %v345 = vmax.f32 %v281, 0.0
    %v346 = vmax.f32 %v282, 0.0
    %v347 = vmax.f32 %v283, 0.0
    %v348 = vmax.f32 %v284, 0.0
    %v349 = vmax.f32 %v285, 0.0
    %v350 = vmax.f32 %v286, 0.0
    %v351 = vmax.f32 %v287, 0.0
    %v352 = vmax.f32 %v288, 0.0
    %v353 = vmax.f32 %v289, 0.0
    %v354 = vmax.f32 %v290, 0.0
    %v355 = vmax.f32 %v291, 0.0
    %v356 = vmax.f32 %v292, 0.0
    %v357 = vmax.f32 %v293, 0.0
    %v358 = vmax.f32 %v294, 0.0
    %v359 = vmax.f32 %v295, 0.0
    %v360 = vmax.f32 %v296, 0.0
    %v361 = vmax.f32 %v297, 0.0
    %v362 = vmax.f32 %v298, 0.0
    %v363 = vmax.f32 %v299, 0.0
    %v364 = vmax.f32 %v300, 0.0
    %v365 = vmax.f32 %v301, 0.0
    %v366 = vmax.f32 %v302, 0.0
    %v367 = vmax.f32 %v303, 0.0
    %v368 = vmax.f32 %v304, 0.0
    %v369 = vmax.f32 %v305, 0.0
    %v370 = vmax.f32 %v306, 0.0
    %v371 = vmax.f32 %v307, 0.0
    %v372 = vmax.f32 %v308, 0.0
    %v373 = vmax.f32 %v309, 0.0
    %v374 = vmax.f32 %v310, 0.0
    %v375 = vmax.f32 %v311, 0.0
    %v376 = vmax.f32 %v312, 0.0
    %v377 = vmax.f32 %v313, 0.0
    %v378 = vmax.f32 %v314, 0.0
    %v379 = vmax.f32 %v315, 0.0
    %v380 = vmax.f32 %v316, 0.0
    %v381 = vmax.f32 %v317, 0.0
    %v382 = vmax.f32 %v318, 0.0
    %v383 = vmax.f32 %v319, 0.0
    %v384 = vmax.f32 %v320, 0.0
    %v385 = vmax.f32 %v321, 0.0
    %386 = vst [vmem:[#allocation8] sm:$0xff] %v322
    %387 = vst [vmem:[#allocation8 + $0x8] sm:$0xff] %v323
    %388 = vst [vmem:[#allocation8 + $0x10] sm:$0xff] %v324
    %389 = vst [vmem:[#allocation8 + $0x18] sm:$0xff] %v325
    %390 = vst [vmem:[#allocation8 + $0x20] sm:$0xff] %v326
    %391 = vst [vmem:[#allocation8 + $0x28] sm:$0xff] %v327
    %392 = vst [vmem:[#allocation8 + $0x30] sm:$0xff] %v328
    %393 = vst [vmem:[#allocation8 + $0x38] sm:$0xff] %v329
    %394 = vst [vmem:[#allocation8 + $0x40] sm:$0xff] %v330
    %395 = vst [vmem:[#allocation8 + $0x48] sm:$0xff] %v331
    %396 = vst [vmem:[#allocation8 + $0x50] sm:$0xff] %v332
    %397 = vst [vmem:[#allocation8 + $0x58] sm:$0xff] %v333
    %398 = vst [vmem:[#allocation8 + $0x60] sm:$0xff] %v334
    %399 = vst [vmem:[#allocation8 + $0x68] sm:$0xff] %v335
    %400 = vst [vmem:[#allocation8 + $0x70] sm:$0xff] %v336
    %401 = vst [vmem:[#allocation8 + $0x78] sm:$0xff] %v337
    %402 = vst [vmem:[#allocation8 + $0x80] sm:$0xff] %v338
    %403 = vst [vmem:[#allocation8 + $0x88] sm:$0xff] %v339
    %404 = vst [vmem:[#allocation8 + $0x90] sm:$0xff] %v340
    %405 = vst [vmem:[#allocation8 + $0x98] sm:$0xff] %v341
    %406 = vst [vmem:[#allocation8 + $0xa0] sm:$0xff] %v342
    %407 = vst [vmem:[#allocation8 + $0xa8] sm:$0xff] %v343
    %408 = vst [vmem:[#allocation8 + $0xb0] sm:$0xff] %v344
    %409 = vst [vmem:[#allocation8 + $0xb8] sm:$0xff] %v345
    %410 = vst [vmem:[#allocation8 + $0xc0] sm:$0xff] %v346
    %411 = vst [vmem:[#allocation8 + $0xc8] sm:$0xff] %v347
    %412 = vst [vmem:[#allocation8 + $0xd0] sm:$0xff] %v348
    %413 = vst [vmem:[#allocation8 + $0xd8] sm:$0xff] %v349
    %414 = vst [vmem:[#allocation8 + $0xe0] sm:$0xff] %v350
    %415 = vst [vmem:[#allocation8 + $0xe8] sm:$0xff] %v351
    %416 = vst [vmem:[#allocation8 + $0xf0] sm:$0xff] %v352
    %417 = vst [vmem:[#allocation8 + $0xf8] sm:$0xff] %v353
    %418 = vst [vmem:[#allocation8 + $0x100] sm:$0xff] %v354
    %419 = vst [vmem:[#allocation8 + $0x108] sm:$0xff] %v355
    %420 = vst [vmem:[#allocation8 + $0x110] sm:$0xff] %v356
    %421 = vst [vmem:[#allocation8 + $0x118] sm:$0xff] %v357
    %422 = vst [vmem:[#allocation8 + $0x120] sm:$0xff] %v358
    %423 = vst [vmem:[#allocation8 + $0x128] sm:$0xff] %v359
    %424 = vst [vmem:[#allocation8 + $0x130] sm:$0xff] %v360
    %425 = vst [vmem:[#allocation8 + $0x138] sm:$0xff] %v361
    %426 = vst [vmem:[#allocation8 + $0x140] sm:$0xff] %v362
    %427 = vst [vmem:[#allocation8 + $0x148] sm:$0xff] %v363
    %428 = vst [vmem:[#allocation8 + $0x150] sm:$0xff] %v364
    %429 = vst [vmem:[#allocation8 + $0x158] sm:$0xff] %v365
    %430 = vst [vmem:[#allocation8 + $0x160] sm:$0xff] %v366
    %431 = vst [vmem:[#allocation8 + $0x168] sm:$0xff] %v367
    %432 = vst [vmem:[#allocation8 + $0x170] sm:$0xff] %v368
    %433 = vst [vmem:[#allocation8 + $0x178] sm:$0xff] %v369
    %434 = vst [vmem:[#allocation8 + $0x180] sm:$0xff] %v370
    %435 = vst [vmem:[#allocation8 + $0x188] sm:$0xff] %v371
    %436 = vst [vmem:[#allocation8 + $0x190] sm:$0xff] %v372
    %437 = vst [vmem:[#allocation8 + $0x198] sm:$0xff] %v373
    %438 = vst [vmem:[#allocation8 + $0x1a0] sm:$0xff] %v374
    %439 = vst [vmem:[#allocation8 + $0x1a8] sm:$0xff] %v375
    %440 = vst [vmem:[#allocation8 + $0x1b0] sm:$0xff] %v376
    %441 = vst [vmem:[#allocation8 + $0x1b8] sm:$0xff] %v377
    %442 = vst [vmem:[#allocation8 + $0x1c0] sm:$0xff] %v378
    %443 = vst [vmem:[#allocation8 + $0x1c8] sm:$0xff] %v379
    %444 = vst [vmem:[#allocation8 + $0x1d0] sm:$0xff] %v380
    %445 = vst [vmem:[#allocation8 + $0x1d8] sm:$0xff] %v381
    %446 = vst [vmem:[#allocation8 + $0x1e0] sm:$0xff] %v382
    %447 = vst [vmem:[#allocation8 + $0x1e8] sm:$0xff] %v383
    %448 = vst [vmem:[#allocation8 + $0x1f0] sm:$0xff] %v384
    %449 = vst [vmem:[#allocation8 + $0x1f8] sm:$0xff] %v385
    // Predicated region
    $region26: #{basic_conv2d.3} parent=1 // pred_check
      _
    $region27: #{basic_conv2d.3} parent=1 // pred_check_branch
      %451 = sbr.rel (0) target = $region29
    $region28: #{basic_conv2d.3} parent=1 // pred_region
      %s453 = ssub.s32 8192, 8192
      %454 = vsyncadd [#allocation4], %s453
      %s455 = sshll.u32 [#allocation8], 4
      %s456 = int_to_ptr.vmem [resolvable:$true] %s455
      %461 = dma.vmem_to_hbm [thread:$0]  %s456, 8192, %s3, [#allocation4], 128, 128, 8
    $region29: #{basic_conv2d.3} parent=1 // pred_fallthru
      _
    // Predicated region
    $region30: #{basic_conv2d.3} parent=1 // pred_check
      _
    $region31: #{basic_conv2d.3} parent=1 // pred_check_branch
      %463 = sbr.rel (0) target = $region33
    $region32: #{basic_conv2d.3} parent=1 // pred_region
      %464 = dma.done [#allocation4], 8192
    $region33: #{basic_conv2d.3} parent=1 // pred_fallthru
      _
    %465 = vsyncpa [#allocation3], 1
    %466 = vsyncpa [#allocation6], 1
    %467 = vsyncpa [#allocation4], 1

// kernel: basic_conv2d.2
$region0: #{basic_conv2d.2}
  #allocation0 [shape = 'u32[]', space=smem, size = 0x4, offset = 0x4, fixed_abs, tag = 'smem constant byte address 0x4 - core index']
  #allocation1 [shape = 'u32[144,128]{1,0:T(1,128)}', space=vmem, size = 0x12000, scoped, tag = 'internal scratch']
  %s0 = inlined_call_operand.hbm [shape: bf16[2,18,16,12], index: 0, kind: input, shape index: {}]
  %s1 = inlined_call_operand.hbm [shape: bf16[3,12,128], index: 1, kind: input, shape index: {}]
  %s2 = inlined_call_operand.hbm [shape: bf16[2,256,128], index: 2, kind: output, shape index: {0}]
  %s3 = inlined_call_operand.hbm [shape: f32[2,8,128], index: 3, kind: output, shape index: {1}]
  %s4 = inlined_call_operand.hbm [shape: f32[2,8,128], index: 4, kind: output, shape index: {2}]
  %5 = xla_tuple %s2, %s3, %s4
  %s6 = sld [smem:[#allocation0]]
  $region65: #{basic_conv2d.2} parent=0
    _
  %s8 = ssub.s32 1, %s6
  %s9 = scalar_select 0, %s8, %s6
  $region1: #{basic_conv2d.2} parent=0
    #allocation2 [shape = 'u8[147456]{0}', space=vmem, size = 0x24000, scoped, tag = 'input window, operand 0']
    #allocation3 [shape = 's32[2]{0}', space=sflag, size = 0x8, scoped, tag = 'scoped memory for basic_conv2d.2']
    #allocation4 [shape = 's32[2]{0}', space=sflag, size = 0x8, scoped, tag = 'scoped memory for basic_conv2d.2']
    #allocation5 [shape = 'u8[12288]{0}', space=vmem, size = 0x3000, scoped, tag = 'input window, operand 1, single buffered']
    #allocation6 [shape = 's32[1]{0}', space=sflag, size = 0x4, scoped, tag = 'scoped memory for basic_conv2d.2']
    #allocation7 [shape = 'u8[131072]{0}', space=vmem, size = 0x20000, scoped, tag = 'output window, operand 0']
    #allocation8 [shape = 'u8[8192]{0}', space=vmem, size = 0x2000, scoped, tag = 'output window, operand 1']
    #allocation9 [shape = 's32[2]{0}', space=sflag, size = 0x8, scoped, tag = 'scoped memory for basic_conv2d.2']
    #allocation10 [shape = 'u8[8192]{0}', space=vmem, size = 0x2000, scoped, tag = 'output window, operand 2']
    %10 = vsyncpa [#allocation3], 0
    %s11 = scalar_lea.sflag [#allocation3], 1
    %12 = vsyncpa %s11, 0
    %13 = vsyncpa [#allocation6], 0
    %14 = vsyncpa [#allocation4], 0
    %s15 = scalar_lea.sflag [#allocation4], 1
    %16 = vsyncpa %s15, 0
    %17 = vsyncpa [#allocation9], 0
    %s18 = scalar_lea.sflag [#allocation9], 1
    %19 = vsyncpa %s18, 0
    loop: start=0, step=1, limit=4
    $region2: #{basic_conv2d.2} parent=1 // loop_pre_header
      _
    $region3: #{basic_conv2d.2} parent=1 // loop_header
      %s21 = sphi 0, %s25
      %p22 = scmp.ge.s32.totalorder %s21, 4
      %s31 = sphi 0, %s33
      %s34 = sphi 0, %s31
      %s35 = sphi 0, %s34
      %s51 = sphi 0, %s35
      %s55 = sphi 0, %s55
      %s57 = sphi 0, %s55
      %s58 = sphi 0, %s57
      %s72 = sphi 0, %s58
      %s78 = sphi 0, %s80
      %s81 = sphi 0, %s78
      %s82 = sphi 0, %s81
      %s98 = sphi 0, %s82
      %s104 = sphi 0, %s106
      %s107 = sphi 0, %s104
      %s108 = sphi 0, %s107
      %s124 = sphi 0, %s108
      %s130 = sphi 0, %s132
      %s133 = sphi 0, %s130
      %s134 = sphi 0, %s133
      %s150 = sphi 0, %s134
    $region4: #{basic_conv2d.2} parent=1 // loop_header_branch
      %24 = sbr.rel (%p22) target = $region8
    $region5: #{basic_conv2d.2} parent=1 // loop_body
      %s26 = ssub.s32 %s21, 1
      %s27 = ssub.s32 %s21, 2
      %s28 = sadd.s32 %s21, 1
      %s29 = ssub.s32 %s21, %s28
      %p30 = scmp.eq.s32.totalorder %s29, 0
      %s32 = sadd.s32 %s31, 1
      %s33 = scalar_select %p30, %s31, %s32
      %p36 = pneg %p30
      %p37 = scmp.eq.s32.totalorder %s21, 1
      %p38 = por %p36, %p37
      %p39 = scmp.ne.s32.totalorder %s31, %s34
      %p40 = scmp.eq.s32.totalorder %s21, 0
      %p41 = por %p39, %p40
      %p42 = scmp.ne.s32.totalorder %s31, %s34
      %p43 = scmp.eq.s32.totalorder %s26, 1
      %p44 = por %p42, %p43
      %p45 = scmp.ne.s32.totalorder %s34, %s35
      %p46 = scmp.eq.s32.totalorder %s26, 0
      %p47 = por %p45, %p46
      %p48 = scmp.ne.s32.totalorder %s34, %s35
      %p49 = scmp.eq.s32.totalorder %s27, 1
      %p50 = por %p48, %p49
      %p52 = scmp.ne.s32.totalorder %s35, %s51
      %p53 = scmp.eq.s32.totalorder %s27, 0
      %p54 = por %p52, %p53
      %s56 = sadd.s32 %s55, 1
      %p59 = scmp.eq.s32.totalorder %s21, 1
      %p60 = scmp.ne.s32.totalorder %s55, %s57
      %p61 = scmp.eq.s32.totalorder %s21, 0
      %p62 = por %p60, %p61
      %p63 = scmp.ne.s32.totalorder %s55, %s57
      %p64 = scmp.eq.s32.totalorder %s26, 1
      %p65 = por %p63, %p64
      %p66 = scmp.ne.s32.totalorder %s57, %s58
      %p67 = scmp.eq.s32.totalorder %s26, 0
      %p68 = por %p66, %p67
      %p69 = scmp.ne.s32.totalorder %s57, %s58
      %p70 = scmp.eq.s32.totalorder %s27, 1
      %p71 = por %p69, %p70
      %p73 = scmp.ne.s32.totalorder %s58, %s72
      %p74 = scmp.eq.s32.totalorder %s27, 0
      %p75 = por %p73, %p74
      %s76 = ssub.s32 %s21, %s28
      %p77 = scmp.eq.s32.totalorder %s76, 0
      %s79 = sadd.s32 %s78, 1
      %s80 = scalar_select %p77, %s78, %s79
      %p83 = pneg %p77
      %p84 = scmp.eq.s32.totalorder %s21, 1
      %p85 = por %p83, %p84
      %p86 = scmp.ne.s32.totalorder %s78, %s81
      %p87 = scmp.eq.s32.totalorder %s21, 0
      %p88 = por %p86, %p87
      %p89 = scmp.ne.s32.totalorder %s78, %s81
      %p90 = scmp.eq.s32.totalorder %s26, 1
      %p91 = por %p89, %p90
      %p92 = scmp.ne.s32.totalorder %s81, %s82
      %p93 = scmp.eq.s32.totalorder %s26, 0
      %p94 = por %p92, %p93
      %p95 = scmp.ne.s32.totalorder %s81, %s82
      %p96 = scmp.eq.s32.totalorder %s27, 1
      %p97 = por %p95, %p96
      %p99 = scmp.ne.s32.totalorder %s82, %s98
      %p100 = scmp.eq.s32.totalorder %s27, 0
      %p101 = por %p99, %p100
      %s102 = ssub.s32 %s21, %s28
      %p103 = scmp.eq.s32.totalorder %s102, 0
      %s105 = sadd.s32 %s104, 1
      %s106 = scalar_select %p103, %s104, %s105
      %p109 = pneg %p103
      %p110 = scmp.eq.s32.totalorder %s21, 1
      %p111 = por %p109, %p110
      %p112 = scmp.ne.s32.totalorder %s104, %s107
      %p113 = scmp.eq.s32.totalorder %s21, 0
      %p114 = por %p112, %p113
      %p115 = scmp.ne.s32.totalorder %s104, %s107
      %p116 = scmp.eq.s32.totalorder %s26, 1
      %p117 = por %p115, %p116
      %p118 = scmp.ne.s32.totalorder %s107, %s108
      %p119 = scmp.eq.s32.totalorder %s26, 0
      %p120 = por %p118, %p119
      %p121 = scmp.ne.s32.totalorder %s107, %s108
      %p122 = scmp.eq.s32.totalorder %s27, 1
      %p123 = por %p121, %p122
      %p125 = scmp.ne.s32.totalorder %s108, %s124
      %p126 = scmp.eq.s32.totalorder %s27, 0
      %p127 = por %p125, %p126
      %s128 = ssub.s32 %s21, %s28
      %p129 = scmp.eq.s32.totalorder %s128, 0
      %s131 = sadd.s32 %s130, 1
      %s132 = scalar_select %p129, %s130, %s131
      %p135 = pneg %p129
      %p136 = scmp.eq.s32.totalorder %s21, 1
      %p137 = por %p135, %p136
      %p138 = scmp.ne.s32.totalorder %s130, %s133
      %p139 = scmp.eq.s32.totalorder %s21, 0
      %p140 = por %p138, %p139
      %p141 = scmp.ne.s32.totalorder %s130, %s133
      %p142 = scmp.eq.s32.totalorder %s26, 1
      %p143 = por %p141, %p142
      %p144 = scmp.ne.s32.totalorder %s133, %s134
      %p145 = scmp.eq.s32.totalorder %s26, 0
      %p146 = por %p144, %p145
      %p147 = scmp.ne.s32.totalorder %s133, %s134
      %p148 = scmp.eq.s32.totalorder %s27, 1
      %p149 = por %p147, %p148
      %p151 = scmp.ne.s32.totalorder %s134, %s150
      %p152 = scmp.eq.s32.totalorder %s27, 0
      %p153 = por %p151, %p152
      %p154 = scmp.le.s32.totalorder 1, %s21
      %p155 = scmp.lt.s32.totalorder %s21, 3
      %p156 = pnand %p154, %p155
      %p157 = pneg %p156
      // Predicated region
      $region9: #{basic_conv2d.2} parent=5 // pred_check
        _
      $region10: #{basic_conv2d.2} parent=5 // pred_check_branch
        %159 = sbr.rel (%p156) target = $region12
      $region11: #{basic_conv2d.2} parent=5 // pred_region
        %s160 = ssub.s32 %s21, 1
        // Predicated region
        $region13: #{basic_conv2d.2} parent=11 // pred_check
          %p161 = pneg %p68
        $region14: #{basic_conv2d.2} parent=11 // pred_check_branch
          %163 = sbr.rel (%p161) target = $region16
        $region15: #{basic_conv2d.2} parent=11 // pred_region
          %s165 = ssub.s32 384, 384
          %166 = vsyncadd [#allocation6], %s165
          %s167 = sshll.u32 [#allocation5], 4
          %s168 = int_to_ptr.vmem [resolvable:$true] %s167
          %173 = dma.hbm_to_vmem [thread:$0]  %s1, 384, %s168, [#allocation6], 64, 64, 4
        $region16: #{basic_conv2d.2} parent=11 // pred_fallthru
          _
      $region12: #{basic_conv2d.2} parent=5 // pred_fallthru
        _
      %p174 = scmp.lt.s32.totalorder %s21, 2
      // Predicated region
      $region17: #{basic_conv2d.2} parent=5 // pred_check
        %p175 = pneg %p174
      $region18: #{basic_conv2d.2} parent=5 // pred_check_branch
        %177 = sbr.rel (%p175) target = $region20
      $region19: #{basic_conv2d.2} parent=5 // pred_region
        // Predicated region
        $region21: #{basic_conv2d.2} parent=19 // pred_check
          %p178 = pneg %p41
        $region22: #{basic_conv2d.2} parent=19 // pred_check_branch
          %180 = sbr.rel (%p178) target = $region24
        $region23: #{basic_conv2d.2} parent=19 // pred_region
          %s181 = sand.u32 %s31, 1
          %s182 = scalar_lea.sflag [#allocation3], %s181
          %s183 = sand.u32 %s31, 1
          %s184 = smul.addr %s183, 144
          %s185 = scalar_lea.vmem [#allocation2], %s184
          %s187 = ssub.s32 2304, 2304
          %188 = vsyncadd %s182, %s187
          %s189 = smul.addr %s21, 36
          %s190 = smul.addr %s189, 64
          %s191 = scalar_lea.hbm %s0, %s190
          %s192 = sshll.u32 %s185, 4
          %s193 = int_to_ptr.vmem [resolvable:$true] %s192
          %198 = dma.hbm_to_vmem [thread:$0]  %s191, 2304, %s193, %s182, 64, 64, 4
        $region24: #{basic_conv2d.2} parent=19 // pred_fallthru
          _
      $region20: #{basic_conv2d.2} parent=5 // pred_fallthru
        _
      %p199 = scmp.le.s32.totalorder 1, %s21
      %p200 = scmp.lt.s32.totalorder %s21, 3
      %p201 = pnand %p199, %p200
      %p202 = pneg %p201
      // Predicated region
      $region25: #{basic_conv2d.2} parent=5 // pred_check
        _
      $region26: #{basic_conv2d.2} parent=5 // pred_check_branch
        %204 = sbr.rel (%p201) target = $region28
      $region27: #{basic_conv2d.2} parent=5 // pred_region
        %s205 = ssub.s32 %s21, 1
        %s206 = sand.u32 %s34, 1
        %s207 = scalar_lea.sflag [#allocation3], %s206
        %s208 = sand.u32 %s34, 1
        %s209 = smul.addr %s208, 144
        %s210 = scalar_lea.vmem [#allocation2], %s209
        // Predicated region
        $region29: #{basic_conv2d.2} parent=27 // pred_check
          %p211 = pneg %p47
        $region30: #{basic_conv2d.2} parent=27 // pred_check_branch
          %213 = sbr.rel (%p211) target = $region32
        $region31: #{basic_conv2d.2} parent=27 // pred_region
          %214 = dma.done %s207, 2304
        $region32: #{basic_conv2d.2} parent=27 // pred_fallthru
          _
        // Predicated region
        $region33: #{basic_conv2d.2} parent=27 // pred_check
          %p215 = pneg %p68
        $region34: #{basic_conv2d.2} parent=27 // pred_check_branch
          %217 = sbr.rel (%p215) target = $region36
        $region35: #{basic_conv2d.2} parent=27 // pred_region
          %218 = dma.done [#allocation6], 384
        $region36: #{basic_conv2d.2} parent=27 // pred_fallthru
          _
        %s219 = sand.u32 %s34, 1
        %s220 = scalar_lea.sflag [#allocation3], %s219
        %s221 = sand.u32 %s34, 1
        %s222 = smul.addr %s221, 144
        %s223 = scalar_lea.vmem [#allocation2], %s222
        %p224 = pneg %p47
        %p225 = pneg %p44
        %p226 = pneg %p68
        %p227 = pneg %p65
        %p228 = pneg %p94
        %p229 = pneg %p91
        %s230 = sand.u32 %s81, 1
        %s231 = scalar_lea.sflag [#allocation4], %s230
        %s232 = sand.u32 %s81, 1
        %s233 = smul.addr %s232, 128
        %s234 = scalar_lea.vmem [#allocation7], %s233
        %p235 = pneg %p120
        %p236 = pneg %p117
        %s237 = sand.u32 %s26, 1
        %s238 = scalar_lea.sflag [#allocation9], %s237
        %s239 = sand.u32 %s107, 1
        %s240 = smul.addr %s239, 8
        %s241 = scalar_lea.vmem [#allocation8], %s240
        %p242 = pneg %p146
        %p243 = pneg %p143
        %s244 = sand.u32 %s26, 1
        %s245 = scalar_lea.sflag [#allocation9], %s244
        %s246 = sand.u32 %s133, 1
        %s247 = smul.addr %s246, 8
        %s248 = scalar_lea.vmem [#allocation10], %s247
        %v250 = vld [vmem:[%s210] sm:$0xf]
        %v251 = vld [vmem:[%s210 + $0x4] sm:$0xf]
        %v252 = vld [vmem:[%s210 + $0x8] sm:$0xf]
        %v253 = vld [vmem:[%s210 + $0xc] sm:$0xf]
        %v254 = vld [vmem:[%s210 + $0x10] sm:$0xf]
        %v255 = vld [vmem:[%s210 + $0x14] sm:$0xf]
        %v256 = vld [vmem:[%s210 + $0x18] sm:$0xf]
        %v257 = vld [vmem:[%s210 + $0x1c] sm:$0xf]
        %v258 = vld [vmem:[%s210 + $0x20] sm:$0xf]
        %v259 = vld [vmem:[%s210 + $0x24] sm:$0xf]
        %v260 = vld [vmem:[%s210 + $0x28] sm:$0xf]
        %v261 = vld [vmem:[%s210 + $0x2c] sm:$0xf]
        %v262 = vld [vmem:[%s210 + $0x30] sm:$0xf]
        %v263 = vld [vmem:[%s210 + $0x34] sm:$0xf]
        %v264 = vld [vmem:[%s210 + $0x38] sm:$0xf]
        %v265 = vld [vmem:[%s210 + $0x3c] sm:$0xf]
        %v266 = vld [vmem:[%s210 + $0x40] sm:$0xf]
        %v267 = vld [vmem:[%s210 + $0x44] sm:$0xf]
        %v268 = vld [vmem:[%s210 + $0x48] sm:$0xf]
        %v269 = vld [vmem:[%s210 + $0x4c] sm:$0xf]
        %v270 = vld [vmem:[%s210 + $0x50] sm:$0xf]
        %v271 = vld [vmem:[%s210 + $0x54] sm:$0xf]
        %v272 = vld [vmem:[%s210 + $0x58] sm:$0xf]
        %v273 = vld [vmem:[%s210 + $0x5c] sm:$0xf]
        %v274 = vld [vmem:[%s210 + $0x60] sm:$0xf]
        %v275 = vld [vmem:[%s210 + $0x64] sm:$0xf]
        %v276 = vld [vmem:[%s210 + $0x68] sm:$0xf]
        %v277 = vld [vmem:[%s210 + $0x6c] sm:$0xf]
        %v278 = vld [vmem:[%s210 + $0x70] sm:$0xf]
        %v279 = vld [vmem:[%s210 + $0x74] sm:$0xf]
        %v280 = vld [vmem:[%s210 + $0x78] sm:$0xf]
        %v281 = vld [vmem:[%s210 + $0x7c] sm:$0xf]
        %v282 = vld [vmem:[#allocation5] sm:$0xf]
        %v283 = vld [vmem:[#allocation5 + $0x4] sm:$0x3]
        %s284 = scalar_lea.vmem %s210, 8 [#allocation2]
        %v285 = vld [vmem:[%s284] sm:$0xf]
        %v286 = vld [vmem:[%s284 + $0x4] sm:$0xf]
        %v287 = vld [vmem:[%s284 + $0x8] sm:$0xf]
        %v288 = vld [vmem:[%s284 + $0xc] sm:$0xf]
        %v289 = vld [vmem:[%s284 + $0x10] sm:$0xf]
        %v290 = vld [vmem:[%s284 + $0x14] sm:$0xf]
        %v291 = vld [vmem:[%s284 + $0x18] sm:$0xf]
        %v292 = vld [vmem:[%s284 + $0x1c] sm:$0xf]
        %v293 = vld [vmem:[%s284 + $0x20] sm:$0xf]
        %v294 = vld [vmem:[%s284 + $0x24] sm:$0xf]
        %v295 = vld [vmem:[%s284 + $0x28] sm:$0xf]
        %v296 = vld [vmem:[%s284 + $0x2c] sm:$0xf]
        %v297 = vld [vmem:[%s284 + $0x30] sm:$0xf]
        %v298 = vld [vmem:[%s284 + $0x34] sm:$0xf]
        %v299 = vld [vmem:[%s284 + $0x38] sm:$0xf]
        %v300 = vld [vmem:[%s284 + $0x3c] sm:$0xf]
        %v301 = vld [vmem:[%s284 + $0x40] sm:$0xf]
        %v302 = vld [vmem:[%s284 + $0x44] sm:$0xf]
        %v303 = vld [vmem:[%s284 + $0x48] sm:$0xf]
        %v304 = vld [vmem:[%s284 + $0x4c] sm:$0xf]
        %v305 = vld [vmem:[%s284 + $0x50] sm:$0xf]
        %v306 = vld [vmem:[%s284 + $0x54] sm:$0xf]
        %v307 = vld [vmem:[%s284 + $0x58] sm:$0xf]
        %v308 = vld [vmem:[%s284 + $0x5c] sm:$0xf]
        %v309 = vld [vmem:[%s284 + $0x60] sm:$0xf]
        %v310 = vld [vmem:[%s284 + $0x64] sm:$0xf]
        %v311 = vld [vmem:[%s284 + $0x68] sm:$0xf]
        %v312 = vld [vmem:[%s284 + $0x6c] sm:$0xf]
        %v313 = vld [vmem:[%s284 + $0x70] sm:$0xf]
        %v314 = vld [vmem:[%s284 + $0x74] sm:$0xf]
        %v315 = vld [vmem:[%s284 + $0x78] sm:$0xf]
        %v316 = vld [vmem:[%s284 + $0x7c] sm:$0xf]
        %s317 = scalar_lea.vmem [#allocation5], 8
        %v318 = vld [vmem:[%s317] sm:$0xf]
        %v319 = vld [vmem:[%s317 + $0x4] sm:$0x3]
        %v352 = vunpack.c.l.b16 %v285
        %v353 = vunpack.c.l.b16 %v286
        %v354 = vunpack.c.l.b16 %v287
        %v355 = vunpack.c.l.b16 %v288
        %v356 = vunpack.c.l.b16 %v289
        %v357 = vunpack.c.l.b16 %v290
        %v358 = vunpack.c.l.b16 %v291
        %v359 = vunpack.c.l.b16 %v292
        %v360 = vunpack.c.l.b16 %v293
        %v361 = vunpack.c.l.b16 %v294
        %v362 = vunpack.c.l.b16 %v295
        %v363 = vunpack.c.l.b16 %v296
        %v364 = vunpack.c.l.b16 %v297
        %v365 = vunpack.c.l.b16 %v298
        %v366 = vunpack.c.l.b16 %v299
        %v367 = vunpack.c.l.b16 %v300
        %v368 = vunpack.c.l.b16 %v301
        %v369 = vunpack.c.l.b16 %v302
        %v370 = vunpack.c.l.b16 %v303
        %v371 = vunpack.c.l.b16 %v304
        %v372 = vunpack.c.l.b16 %v305
        %v373 = vunpack.c.l.b16 %v306
        %v374 = vunpack.c.l.b16 %v307
        %v375 = vunpack.c.l.b16 %v308
        %v376 = vunpack.c.l.b16 %v309
        %v377 = vunpack.c.l.b16 %v310
        %v378 = vunpack.c.l.b16 %v311
        %v379 = vunpack.c.l.b16 %v312
        %v380 = vunpack.c.l.b16 %v313
        %v381 = vunpack.c.l.b16 %v314
        %v382 = vunpack.c.l.b16 %v315
        %v383 = vunpack.c.l.b16 %v316
        %v384 = vpack.c.b16 %v353, %v352
        %v385 = vpack.c.b16 %v355, %v354
        %v386 = vpack.c.b16 %v357, %v356
        %v387 = vpack.c.b16 %v359, %v358
        %v388 = vpack.c.b16 %v361, %v360
        %v389 = vpack.c.b16 %v363, %v362
        %v390 = vpack.c.b16 %v365, %v364
        %v391 = vpack.c.b16 %v367, %v366
        %v392 = vpack.c.b16 %v369, %v368
        %v393 = vpack.c.b16 %v371, %v370
        %v394 = vpack.c.b16 %v373, %v372
        %v395 = vpack.c.b16 %v375, %v374
        %v396 = vpack.c.b16 %v377, %v376
        %v397 = vpack.c.b16 %v379, %v378
        %v398 = vpack.c.b16 %v381, %v380
        %v399 = vpack.c.b16 %v383, %v382
        %v402 = vunpack.c.l.b16 %v318
        %v403 = vunpack.c.l.b16 %v319
        %v404 = vpack.c.b16 %v403, %v402
        %vm405 = vcmask 97280
        %v407 = vsel %vm405, %v384, 0
        %v410 = vsel %vm405, %v385, 0
        %v413 = vsel %vm405, %v386, 0
        %v416 = vsel %vm405, %v387, 0
        %v419 = vsel %vm405, %v388, 0
        %v422 = vsel %vm405, %v389, 0
        %v425 = vsel %vm405, %v390, 0
        %v428 = vsel %vm405, %v391, 0
        %v431 = vsel %vm405, %v392, 0
        %v434 = vsel %vm405, %v393, 0
        %v437 = vsel %vm405, %v394, 0
        %v440 = vsel %vm405, %v395, 0
        %v443 = vsel %vm405, %v396, 0
        %v446 = vsel %vm405, %v397, 0
        %v449 = vsel %vm405, %v398, 0
        %v452 = vsel %vm405, %v399, 0
        %vm454 = vcmask 1045504
        %v456 = vsel %vm454, %v404, 0
        %458 = vmatprep.subr.bf16.mxu0 0
        %459 = vmatpush1.bf16.msra.mxu0 %v456
        %460 = vmatprep.subr.bf16.mxu0 0
        %461 = vmatpush1.bf16.msra.mxu0 0
        %462 = vmatprep.subr.bf16.mxu0 0
        %463 = vmatpush1.bf16.msra.mxu0 0
        %464 = vmatprep.subr.bf16.mxu0 0
        %465 = vmatpush1.bf16.msra.mxu0 0
        %466 = vmatprep.subr.bf16.mxu0 0
        %467 = vmatpush1.bf16.msra.mxu0 0
        %468 = vmatprep.subr.bf16.mxu0 0
        %469 = vmatpush1.bf16.msra.mxu0 0
        %470 = vmatprep.subr.bf16.mxu0 0
        %471 = vmatpush1.bf16.msra.mxu0 0
        %472 = vmatprep.subr.bf16.mxu0 0
        %473 = vmatpush1.bf16.msra.mxu0 0
        %474 = vmatprep.subr.bf16.mxu0 0
        %475 = vmatpush1.bf16.msra.mxu0 0
        %476 = vmatprep.subr.bf16.mxu0 0
        %477 = vmatpush1.bf16.msra.mxu0 0
        %478 = vmatprep.subr.bf16.mxu0 0
        %479 = vmatpush1.bf16.msra.mxu0 0
        %480 = vmatprep.subr.bf16.mxu0 0
        %481 = vmatpush1.bf16.msra.mxu0 0
        %482 = vmatprep.subr.bf16.mxu0 0
        %483 = vmatpush1.bf16.msra.mxu0 0
        %484 = vmatprep.subr.bf16.mxu0 0
        %485 = vmatpush1.bf16.msra.mxu0 0
        %486 = vmatprep.subr.bf16.mxu0 0
        %487 = vmatpush1.bf16.msra.mxu0 0
        %488 = vmatprep.subr.bf16.mxu0 0
        %489 = vmatpush1.bf16.msra.mxu0 0
        %490 = vmatprep.mubr.bf16.mxu0 0
        %491 = vmatmul.mubr.bf16.gmra.mrb[0].mxu0 %v407
        %v492 = vpop.f32.mrb[0].mxu0
        %v493 = vadd.f32 0.0, %v492
        %v494 = vpop.f32.mrb[0].mxu0
        %v495 = vpop.f32.mrb[0].mxu0
        %v496 = vadd.f32 0.0, %v495
        %v497 = vpop.f32.mrb[0].mxu0
        %498 = vmatprep.mubr.bf16.mxu0 0
        %499 = vmatmul.mubr.bf16.gmra.mrb[0].mxu0 %v410
        %v500 = vpop.f32.mrb[0].mxu0
        %v501 = vadd.f32 0.0, %v500
        %v502 = vpop.f32.mrb[0].mxu0
        %v503 = vpop.f32.mrb[0].mxu0
        %v504 = vadd.f32 0.0, %v503
        %v505 = vpop.f32.mrb[0].mxu0
        %506 = vmatprep.mubr.bf16.mxu0 0
        %507 = vmatmul.mubr.bf16.gmra.mrb[0].mxu0 %v413
        %v508 = vpop.f32.mrb[0].mxu0
        %v509 = vadd.f32 0.0, %v508
        %v510 = vpop.f32.mrb[0].mxu0
        %v511 = vpop.f32.mrb[0].mxu0
        %v512 = vadd.f32 0.0, %v511
        %v513 = vpop.f32.mrb[0].mxu0
        %514 = vmatprep.mubr.bf16.mxu0 0
        %515 = vmatmul.mubr.bf16.gmra.mrb[0].mxu0 %v416
        %v516 = vpop.f32.mrb[0].mxu0
        %v517 = vadd.f32 0.0, %v516
        %v518 = vpop.f32.mrb[0].mxu0
        %v519 = vpop.f32.mrb[0].mxu0
        %v520 = vadd.f32 0.0, %v519
        %v521 = vpop.f32.mrb[0].mxu0
        %522 = vmatprep.mubr.bf16.mxu0 0
        %523 = vmatmul.mubr.bf16.gmra.mrb[0].mxu0 %v419
        %v524 = vpop.f32.mrb[0].mxu0
        %v525 = vadd.f32 0.0, %v524
        %v526 = vpop.f32.mrb[0].mxu0
        %v527 = vpop.f32.mrb[0].mxu0
        %v528 = vadd.f32 0.0, %v527
        %v529 = vpop.f32.mrb[0].mxu0
        %530 = vmatprep.mubr.bf16.mxu0 0
        %531 = vmatmul.mubr.bf16.gmra.mrb[0].mxu0 %v422
        %v532 = vpop.f32.mrb[0].mxu0
        %v533 = vadd.f32 0.0, %v532
        %v534 = vpop.f32.mrb[0].mxu0
        %v535 = vpop.f32.mrb[0].mxu0
        %v536 = vadd.f32 0.0, %v535
        %v537 = vpop.f32.mrb[0].mxu0
        %538 = vmatprep.mubr.bf16.mxu0 0
        %539 = vmatmul.mubr.bf16.gmra.mrb[0].mxu0 %v425
        %v540 = vpop.f32.mrb[0].mxu0
        %v541 = vadd.f32 0.0, %v540
        %v542 = vpop.f32.mrb[0].mxu0
        %v543 = vpop.f32.mrb[0].mxu0
        %v544 = vadd.f32 0.0, %v543
        %v545 = vpop.f32.mrb[0].mxu0
        %546 = vmatprep.mubr.bf16.mxu0 0
        %547 = vmatmul.mubr.bf16.gmra.mrb[0].mxu0 %v428
        %v548 = vpop.f32.mrb[0].mxu0
        %v549 = vadd.f32 0.0, %v548
        %v550 = vpop.f32.mrb[0].mxu0
        %v551 = vpop.f32.mrb[0].mxu0
        %v552 = vadd.f32 0.0, %v551
        %v553 = vpop.f32.mrb[0].mxu0
        %554 = vmatprep.mubr.bf16.mxu0 0
        %555 = vmatmul.mubr.bf16.gmra.mrb[0].mxu0 %v431
        %v556 = vpop.f32.mrb[0].mxu0
        %v557 = vadd.f32 0.0, %v556
        %v558 = vpop.f32.mrb[0].mxu0
        %v559 = vpop.f32.mrb[0].mxu0
        %v560 = vadd.f32 0.0, %v559
        %v561 = vpop.f32.mrb[0].mxu0
        %562 = vmatprep.mubr.bf16.mxu0 0
        %563 = vmatmul.mubr.bf16.gmra.mrb[0].mxu0 %v434
        %v564 = vpop.f32.mrb[0].mxu0
        %v565 = vadd.f32 0.0, %v564
        %v566 = vpop.f32.mrb[0].mxu0
        %v567 = vpop.f32.mrb[0].mxu0
        %v568 = vadd.f32 0.0, %v567
        %v569 = vpop.f32.mrb[0].mxu0
        %570 = vmatprep.mubr.bf16.mxu0 0
        %571 = vmatmul.mubr.bf16.gmra.mrb[0].mxu0 %v437
        %v572 = vpop.f32.mrb[0].mxu0
        %v573 = vadd.f32 0.0, %v572
        %v574 = vpop.f32.mrb[0].mxu0
        %v575 = vpop.f32.mrb[0].mxu0
        %v576 = vadd.f32 0.0, %v575
        %v577 = vpop.f32.mrb[0].mxu0
        %578 = vmatprep.mubr.bf16.mxu0 0
        %579 = vmatmul.mubr.bf16.gmra.mrb[0].mxu0 %v440
        %v580 = vpop.f32.mrb[0].mxu0
        %v581 = vadd.f32 0.0, %v580
        %v582 = vpop.f32.mrb[0].mxu0
        %v583 = vpop.f32.mrb[0].mxu0
        %v584 = vadd.f32 0.0, %v583
        %v585 = vpop.f32.mrb[0].mxu0
        %586 = vmatprep.mubr.bf16.mxu0 0
        %587 = vmatmul.mubr.bf16.gmra.mrb[0].mxu0 %v443
        %v588 = vpop.f32.mrb[0].mxu0
        %v589 = vadd.f32 0.0, %v588
        %v590 = vpop.f32.mrb[0].mxu0
        %v591 = vpop.f32.mrb[0].mxu0
        %v592 = vadd.f32 0.0, %v591
        %v593 = vpop.f32.mrb[0].mxu0
        %594 = vmatprep.mubr.bf16.mxu0 0
        %595 = vmatmul.mubr.bf16.gmra.mrb[0].mxu0 %v446
        %v596 = vpop.f32.mrb[0].mxu0
        %v597 = vadd.f32 0.0, %v596
        %v598 = vpop.f32.mrb[0].mxu0
        %v599 = vpop.f32.mrb[0].mxu0
        %v600 = vadd.f32 0.0, %v599
        %v601 = vpop.f32.mrb[0].mxu0
        %602 = vmatprep.mubr.bf16.mxu0 0
        %603 = vmatmul.mubr.bf16.gmra.mrb[0].mxu0 %v449
        %v604 = vpop.f32.mrb[0].mxu0
        %v605 = vadd.f32 0.0, %v604
        %v606 = vpop.f32.mrb[0].mxu0
        %v607 = vpop.f32.mrb[0].mxu0
        %v608 = vadd.f32 0.0, %v607
        %v609 = vpop.f32.mrb[0].mxu0
        %610 = vmatprep.mubr.bf16.mxu0 0
        %611 = vmatmul.mubr.bf16.gmra.mrb[0].mxu0 %v452
        %v612 = vpop.f32.mrb[0].mxu0
        %v613 = vadd.f32 0.0, %v612
        %v614 = vpop.f32.mrb[0].mxu0
        %v615 = vpop.f32.mrb[0].mxu0
        %v616 = vadd.f32 0.0, %v615
        %v617 = vpop.f32.mrb[0].mxu0
        %618 = vdwg.mxu0
        %v651 = vunpack.c.l.b16 %v250
        %v652 = vunpack.c.l.b16 %v251
        %v653 = vunpack.c.l.b16 %v252
        %v654 = vunpack.c.l.b16 %v253
        %v655 = vunpack.c.l.b16 %v254
        %v656 = vunpack.c.l.b16 %v255
        %v657 = vunpack.c.l.b16 %v256
        %v658 = vunpack.c.l.b16 %v257
        %v659 = vunpack.c.l.b16 %v258
        %v660 = vunpack.c.l.b16 %v259
        %v661 = vunpack.c.l.b16 %v260
        %v662 = vunpack.c.l.b16 %v261
        %v663 = vunpack.c.l.b16 %v262
        %v664 = vunpack.c.l.b16 %v263
        %v665 = vunpack.c.l.b16 %v264
        %v666 = vunpack.c.l.b16 %v265
        %v667 = vunpack.c.l.b16 %v266
        %v668 = vunpack.c.l.b16 %v267
        %v669 = vunpack.c.l.b16 %v268
        %v670 = vunpack.c.l.b16 %v269
        %v671 = vunpack.c.l.b16 %v270
        %v672 = vunpack.c.l.b16 %v271
        %v673 = vunpack.c.l.b16 %v272
        %v674 = vunpack.c.l.b16 %v273
        %v675 = vunpack.c.l.b16 %v274
        %v676 = vunpack.c.l.b16 %v275
        %v677 = vunpack.c.l.b16 %v276
        %v678 = vunpack.c.l.b16 %v277
        %v679 = vunpack.c.l.b16 %v278
        %v680 = vunpack.c.l.b16 %v279
        %v681 = vunpack.c.l.b16 %v280
        %v682 = vunpack.c.l.b16 %v281
        %v683 = vpack.c.b16 %v652, %v651
        %v684 = vpack.c.b16 %v654, %v653
        %v685 = vpack.c.b16 %v656, %v655
        %v686 = vpack.c.b16 %v658, %v657
        %v687 = vpack.c.b16 %v660, %v659
        %v688 = vpack.c.b16 %v662, %v661
        %v689 = vpack.c.b16 %v664, %v663
        %v690 = vpack.c.b16 %v666, %v665
        %v691 = vpack.c.b16 %v668, %v667
        %v692 = vpack.c.b16 %v670, %v669
        %v693 = vpack.c.b16 %v672, %v671
        %v694 = vpack.c.b16 %v674, %v673
        %v695 = vpack.c.b16 %v676, %v675
        %v696 = vpack.c.b16 %v678, %v677
        %v697 = vpack.c.b16 %v680, %v679
        %v698 = vpack.c.b16 %v682, %v681
        %v701 = vunpack.c.l.b16 %v282
        %v702 = vunpack.c.l.b16 %v283
        %v703 = vpack.c.b16 %v702, %v701
        %v705 = vsel %vm405, %v683, 0
        %v708 = vsel %vm405, %v684, 0
        %v711 = vsel %vm405, %v685, 0
        %v714 = vsel %vm405, %v686, 0
        %v717 = vsel %vm405, %v687, 0
        %v720 = vsel %vm405, %v688, 0
        %v723 = vsel %vm405, %v689, 0
        %v726 = vsel %vm405, %v690, 0
        %v729 = vsel %vm405, %v691, 0
        %v732 = vsel %vm405, %v692, 0
        %v735 = vsel %vm405, %v693, 0
        %v738 = vsel %vm405, %v694, 0
        %v741 = vsel %vm405, %v695, 0
        %v744 = vsel %vm405, %v696, 0
        %v747 = vsel %vm405, %v697, 0
        %v750 = vsel %vm405, %v698, 0
        %v753 = vsel %vm454, %v703, 0
        %755 = vmatprep.subr.bf16.mxu0 0
        %756 = vmatpush1.bf16.msra.mxu0 %v753
        %757 = vmatprep.subr.bf16.mxu0 0
        %758 = vmatpush1.bf16.msra.mxu0 0
        %759 = vmatprep.subr.bf16.mxu0 0
        %760 = vmatpush1.bf16.msra.mxu0 0
        %761 = vmatprep.subr.bf16.mxu0 0
        %762 = vmatpush1.bf16.msra.mxu0 0
        %763 = vmatprep.subr.bf16.mxu0 0
        %764 = vmatpush1.bf16.msra.mxu0 0
        %765 = vmatprep.subr.bf16.mxu0 0
        %766 = vmatpush1.bf16.msra.mxu0 0
        %767 = vmatprep.subr.bf16.mxu0 0
        %768 = vmatpush1.bf16.msra.mxu0 0
        %769 = vmatprep.subr.bf16.mxu0 0
        %770 = vmatpush1.bf16.msra.mxu0 0
        %771 = vmatprep.subr.bf16.mxu0 0
        %772 = vmatpush1.bf16.msra.mxu0 0
        %773 = vmatprep.subr.bf16.mxu0 0
        %774 = vmatpush1.bf16.msra.mxu0 0
        %775 = vmatprep.subr.bf16.mxu0 0
        %776 = vmatpush1.bf16.msra.mxu0 0
        %777 = vmatprep.subr.bf16.mxu0 0
        %778 = vmatpush1.bf16.msra.mxu0 0
        %779 = vmatprep.subr.bf16.mxu0 0
        %780 = vmatpush1.bf16.msra.mxu0 0
        %781 = vmatprep.subr.bf16.mxu0 0
        %782 = vmatpush1.bf16.msra.mxu0 0
        %783 = vmatprep.subr.bf16.mxu0 0
        %784 = vmatpush1.bf16.msra.mxu0 0
        %785 = vmatprep.subr.bf16.mxu0 0
        %786 = vmatpush1.bf16.msra.mxu0 0
        %787 = vmatprep.mubr.bf16.mxu0 0
        %788 = vmatmul.mubr.bf16.gmra.mrb[0].mxu0 %v705
        %v789 = vpop.f32.mrb[0].mxu0
        %v790 = vadd.f32 %v493, %v789
        %v791 = vpop.f32.mrb[0].mxu0
        %v792 = vpop.f32.mrb[0].mxu0
        %v793 = vadd.f32 %v496, %v792
        %v794 = vpop.f32.mrb[0].mxu0
        %795 = vmatprep.mubr.bf16.mxu0 0
        %796 = vmatmul.mubr.bf16.gmra.mrb[0].mxu0 %v708
        %v797 = vpop.f32.mrb[0].mxu0
        %v798 = vadd.f32 %v501, %v797
        %v799 = vpop.f32.mrb[0].mxu0
        %v800 = vpop.f32.mrb[0].mxu0
        %v801 = vadd.f32 %v504, %v800
        %v802 = vpop.f32.mrb[0].mxu0
        %803 = vmatprep.mubr.bf16.mxu0 0
        %804 = vmatmul.mubr.bf16.gmra.mrb[0].mxu0 %v711
        %v805 = vpop.f32.mrb[0].mxu0
        %v806 = vadd.f32 %v509, %v805
        %v807 = vpop.f32.mrb[0].mxu0
        %v808 = vpop.f32.mrb[0].mxu0
        %v809 = vadd.f32 %v512, %v808
        %v810 = vpop.f32.mrb[0].mxu0
        %811 = vmatprep.mubr.bf16.mxu0 0
        %812 = vmatmul.mubr.bf16.gmra.mrb[0].mxu0 %v714
        %v813 = vpop.f32.mrb[0].mxu0
        %v814 = vadd.f32 %v517, %v813
        %v815 = vpop.f32.mrb[0].mxu0
        %v816 = vpop.f32.mrb[0].mxu0
        %v817 = vadd.f32 %v520, %v816
        %v818 = vpop.f32.mrb[0].mxu0
        %819 = vmatprep.mubr.bf16.mxu0 0
        %820 = vmatmul.mubr.bf16.gmra.mrb[0].mxu0 %v717
        %v821 = vpop.f32.mrb[0].mxu0
        %v822 = vadd.f32 %v525, %v821
        %v823 = vpop.f32.mrb[0].mxu0
        %v824 = vpop.f32.mrb[0].mxu0
        %v825 = vadd.f32 %v528, %v824
        %v826 = vpop.f32.mrb[0].mxu0
        %827 = vmatprep.mubr.bf16.mxu0 0
        %828 = vmatmul.mubr.bf16.gmra.mrb[0].mxu0 %v720
        %v829 = vpop.f32.mrb[0].mxu0
        %v830 = vadd.f32 %v533, %v829
        %v831 = vpop.f32.mrb[0].mxu0
        %v832 = vpop.f32.mrb[0].mxu0
        %v833 = vadd.f32 %v536, %v832
        %v834 = vpop.f32.mrb[0].mxu0
        %835 = vmatprep.mubr.bf16.mxu0 0
        %836 = vmatmul.mubr.bf16.gmra.mrb[0].mxu0 %v723
        %v837 = vpop.f32.mrb[0].mxu0
        %v838 = vadd.f32 %v541, %v837
        %v839 = vpop.f32.mrb[0].mxu0
        %v840 = vpop.f32.mrb[0].mxu0
        %v841 = vadd.f32 %v544, %v840
        %v842 = vpop.f32.mrb[0].mxu0
        %843 = vmatprep.mubr.bf16.mxu0 0
        %844 = vmatmul.mubr.bf16.gmra.mrb[0].mxu0 %v726
        %v845 = vpop.f32.mrb[0].mxu0
        %v846 = vadd.f32 %v549, %v845
        %v847 = vpop.f32.mrb[0].mxu0
        %v848 = vpop.f32.mrb[0].mxu0
        %v849 = vadd.f32 %v552, %v848
        %v850 = vpop.f32.mrb[0].mxu0
        %851 = vmatprep.mubr.bf16.mxu0 0
        %852 = vmatmul.mubr.bf16.gmra.mrb[0].mxu0 %v729
        %v853 = vpop.f32.mrb[0].mxu0
        %v854 = vadd.f32 %v557, %v853
        %v855 = vpop.f32.mrb[0].mxu0
        %v856 = vpop.f32.mrb[0].mxu0
        %v857 = vadd.f32 %v560, %v856
        %v858 = vpop.f32.mrb[0].mxu0
        %859 = vmatprep.mubr.bf16.mxu0 0
        %860 = vmatmul.mubr.bf16.gmra.mrb[0].mxu0 %v732
        %v861 = vpop.f32.mrb[0].mxu0
        %v862 = vadd.f32 %v565, %v861
        %v863 = vpop.f32.mrb[0].mxu0
        %v864 = vpop.f32.mrb[0].mxu0
        %v865 = vadd.f32 %v568, %v864
        %v866 = vpop.f32.mrb[0].mxu0
        %867 = vmatprep.mubr.bf16.mxu0 0
        %868 = vmatmul.mubr.bf16.gmra.mrb[0].mxu0 %v735
        %v869 = vpop.f32.mrb[0].mxu0
        %v870 = vadd.f32 %v573, %v869
        %v871 = vpop.f32.mrb[0].mxu0
        %v872 = vpop.f32.mrb[0].mxu0
        %v873 = vadd.f32 %v576, %v872
        %v874 = vpop.f32.mrb[0].mxu0
        %875 = vmatprep.mubr.bf16.mxu0 0
        %876 = vmatmul.mubr.bf16.gmra.mrb[0].mxu0 %v738
        %v877 = vpop.f32.mrb[0].mxu0
        %v878 = vadd.f32 %v581, %v877
        %v879 = vpop.f32.mrb[0].mxu0
        %v880 = vpop.f32.mrb[0].mxu0
        %v881 = vadd.f32 %v584, %v880
        %v882 = vpop.f32.mrb[0].mxu0
        %883 = vmatprep.mubr.bf16.mxu0 0
        %884 = vmatmul.mubr.bf16.gmra.mrb[0].mxu0 %v741
        %v885 = vpop.f32.mrb[0].mxu0
        %v886 = vadd.f32 %v589, %v885
        %v887 = vpop.f32.mrb[0].mxu0
        %v888 = vpop.f32.mrb[0].mxu0
        %v889 = vadd.f32 %v592, %v888
        %v890 = vpop.f32.mrb[0].mxu0
        %891 = vmatprep.mubr.bf16.mxu0 0
        %892 = vmatmul.mubr.bf16.gmra.mrb[0].mxu0 %v744
        %v893 = vpop.f32.mrb[0].mxu0
        %v894 = vadd.f32 %v597, %v893
        %v895 = vpop.f32.mrb[0].mxu0
        %v896 = vpop.f32.mrb[0].mxu0
        %v897 = vadd.f32 %v600, %v896
        %v898 = vpop.f32.mrb[0].mxu0
        %899 = vmatprep.mubr.bf16.mxu0 0
        %900 = vmatmul.mubr.bf16.gmra.mrb[0].mxu0 %v747
        %v901 = vpop.f32.mrb[0].mxu0
        %v902 = vadd.f32 %v605, %v901
        %v903 = vpop.f32.mrb[0].mxu0
        %v904 = vpop.f32.mrb[0].mxu0
        %v905 = vadd.f32 %v608, %v904
        %v906 = vpop.f32.mrb[0].mxu0
        %907 = vmatprep.mubr.bf16.mxu0 0
        %908 = vmatmul.mubr.bf16.gmra.mrb[0].mxu0 %v750
        %v909 = vpop.f32.mrb[0].mxu0
        %v910 = vadd.f32 %v613, %v909
        %v911 = vpop.f32.mrb[0].mxu0
        %v912 = vpop.f32.mrb[0].mxu0
        %v913 = vadd.f32 %v616, %v912
        %v914 = vpop.f32.mrb[0].mxu0
        %915 = vdwg.mxu0
        %s916 = scalar_lea.vmem %s210, 16 [#allocation2]
        %v917 = vld [vmem:[%s916] sm:$0xf]
        %v918 = vld [vmem:[%s916 + $0x4] sm:$0xf]
        %v919 = vld [vmem:[%s916 + $0x8] sm:$0xf]
        %v920 = vld [vmem:[%s916 + $0xc] sm:$0xf]
        %v921 = vld [vmem:[%s916 + $0x10] sm:$0xf]
        %v922 = vld [vmem:[%s916 + $0x14] sm:$0xf]
        %v923 = vld [vmem:[%s916 + $0x18] sm:$0xf]
        %v924 = vld [vmem:[%s916 + $0x1c] sm:$0xf]
        %v925 = vld [vmem:[%s916 + $0x20] sm:$0xf]
        %v926 = vld [vmem:[%s916 + $0x24] sm:$0xf]
        %v927 = vld [vmem:[%s916 + $0x28] sm:$0xf]
        %v928 = vld [vmem:[%s916 + $0x2c] sm:$0xf]
        %v929 = vld [vmem:[%s916 + $0x30] sm:$0xf]
        %v930 = vld [vmem:[%s916 + $0x34] sm:$0xf]
        %v931 = vld [vmem:[%s916 + $0x38] sm:$0xf]
        %v932 = vld [vmem:[%s916 + $0x3c] sm:$0xf]
        %v933 = vld [vmem:[%s916 + $0x40] sm:$0xf]
        %v934 = vld [vmem:[%s916 + $0x44] sm:$0xf]
        %v935 = vld [vmem:[%s916 + $0x48] sm:$0xf]
        %v936 = vld [vmem:[%s916 + $0x4c] sm:$0xf]
        %v937 = vld [vmem:[%s916 + $0x50] sm:$0xf]
        %v938 = vld [vmem:[%s916 + $0x54] sm:$0xf]
        %v939 = vld [vmem:[%s916 + $0x58] sm:$0xf]
        %v940 = vld [vmem:[%s916 + $0x5c] sm:$0xf]
        %v941 = vld [vmem:[%s916 + $0x60] sm:$0xf]
        %v942 = vld [vmem:[%s916 + $0x64] sm:$0xf]
        %v943 = vld [vmem:[%s916 + $0x68] sm:$0xf]
        %v944 = vld [vmem:[%s916 + $0x6c] sm:$0xf]
        %v945 = vld [vmem:[%s916 + $0x70] sm:$0xf]
        %v946 = vld [vmem:[%s916 + $0x74] sm:$0xf]
        %v947 = vld [vmem:[%s916 + $0x78] sm:$0xf]
        %v948 = vld [vmem:[%s916 + $0x7c] sm:$0xf]
        %s949 = scalar_lea.vmem [#allocation5], 16
        %v950 = vld [vmem:[%s949] sm:$0xf]
        %v951 = vld [vmem:[%s949 + $0x4] sm:$0x3]
        %v984 = vunpack.c.l.b16 %v917
        %v985 = vunpack.c.l.b16 %v918
        %v986 = vunpack.c.l.b16 %v919
        %v987 = vunpack.c.l.b16 %v920
        %v988 = vunpack.c.l.b16 %v921
        %v989 = vunpack.c.l.b16 %v922
        %v990 = vunpack.c.l.b16 %v923
        %v991 = vunpack.c.l.b16 %v924
        %v992 = vunpack.c.l.b16 %v925
        %v993 = vunpack.c.l.b16 %v926
        %v994 = vunpack.c.l.b16 %v927
        %v995 = vunpack.c.l.b16 %v928
        %v996 = vunpack.c.l.b16 %v929
        %v997 = vunpack.c.l.b16 %v930
        %v998 = vunpack.c.l.b16 %v931
        %v999 = vunpack.c.l.b16 %v932
        %v1000 = vunpack.c.l.b16 %v933
        %v1001 = vunpack.c.l.b16 %v934
        %v1002 = vunpack.c.l.b16 %v935
        %v1003 = vunpack.c.l.b16 %v936
        %v1004 = vunpack.c.l.b16 %v937
        %v1005 = vunpack.c.l.b16 %v938
        %v1006 = vunpack.c.l.b16 %v939
        %v1007 = vunpack.c.l.b16 %v940
        %v1008 = vunpack.c.l.b16 %v941
        %v1009 = vunpack.c.l.b16 %v942
        %v1010 = vunpack.c.l.b16 %v943
        %v1011 = vunpack.c.l.b16 %v944
        %v1012 = vunpack.c.l.b16 %v945
        %v1013 = vunpack.c.l.b16 %v946
        %v1014 = vunpack.c.l.b16 %v947
        %v1015 = vunpack.c.l.b16 %v948
        %v1016 = vpack.c.b16 %v985, %v984
        %v1017 = vpack.c.b16 %v987, %v986
        %v1018 = vpack.c.b16 %v989, %v988
        %v1019 = vpack.c.b16 %v991, %v990
        %v1020 = vpack.c.b16 %v993, %v992
        %v1021 = vpack.c.b16 %v995, %v994
        %v1022 = vpack.c.b16 %v997, %v996
        %v1023 = vpack.c.b16 %v999, %v998
        %v1024 = vpack.c.b16 %v1001, %v1000
        %v1025 = vpack.c.b16 %v1003, %v1002
        %v1026 = vpack.c.b16 %v1005, %v1004
        %v1027 = vpack.c.b16 %v1007, %v1006
        %v1028 = vpack.c.b16 %v1009, %v1008
        %v1029 = vpack.c.b16 %v1011, %v1010
        %v1030 = vpack.c.b16 %v1013, %v1012
        %v1031 = vpack.c.b16 %v1015, %v1014
        %v1034 = vunpack.c.l.b16 %v950
        %v1035 = vunpack.c.l.b16 %v951
        %v1036 = vpack.c.b16 %v1035, %v1034
        %v1038 = vsel %vm405, %v1016, 0
        %v1041 = vsel %vm405, %v1017, 0
        %v1044 = vsel %vm405, %v1018, 0
        %v1047 = vsel %vm405, %v1019, 0
        %v1050 = vsel %vm405, %v1020, 0
        %v1053 = vsel %vm405, %v1021, 0
        %v1056 = vsel %vm405, %v1022, 0
        %v1059 = vsel %vm405, %v1023, 0
        %v1062 = vsel %vm405, %v1024, 0
        %v1065 = vsel %vm405, %v1025, 0
        %v1068 = vsel %vm405, %v1026, 0
        %v1071 = vsel %vm405, %v1027, 0
        %v1074 = vsel %vm405, %v1028, 0
        %v1077 = vsel %vm405, %v1029, 0
        %v1080 = vsel %vm405, %v1030, 0
        %v1083 = vsel %vm405, %v1031, 0
        %v1086 = vsel %vm454, %v1036, 0
        %1088 = vmatprep.subr.bf16.mxu0 0
        %1089 = vmatpush1.bf16.msra.mxu0 %v1086
        %1090 = vmatprep.subr.bf16.mxu0 0
        %1091 = vmatpush1.bf16.msra.mxu0 0
        %1092 = vmatprep.subr.bf16.mxu0 0
        %1093 = vmatpush1.bf16.msra.mxu0 0
        %1094 = vmatprep.subr.bf16.mxu0 0
        %1095 = vmatpush1.bf16.msra.mxu0 0
        %1096 = vmatprep.subr.bf16.mxu0 0
        %1097 = vmatpush1.bf16.msra.mxu0 0
        %1098 = vmatprep.subr.bf16.mxu0 0
        %1099 = vmatpush1.bf16.msra.mxu0 0
        %1100 = vmatprep.subr.bf16.mxu0 0
        %1101 = vmatpush1.bf16.msra.mxu0 0
        %1102 = vmatprep.subr.bf16.mxu0 0
        %1103 = vmatpush1.bf16.msra.mxu0 0
        %1104 = vmatprep.subr.bf16.mxu0 0
        %1105 = vmatpush1.bf16.msra.mxu0 0
        %1106 = vmatprep.subr.bf16.mxu0 0
        %1107 = vmatpush1.bf16.msra.mxu0 0
        %1108 = vmatprep.subr.bf16.mxu0 0
        %1109 = vmatpush1.bf16.msra.mxu0 0
        %1110 = vmatprep.subr.bf16.mxu0 0
        %1111 = vmatpush1.bf16.msra.mxu0 0
        %1112 = vmatprep.subr.bf16.mxu0 0
        %1113 = vmatpush1.bf16.msra.mxu0 0
        %1114 = vmatprep.subr.bf16.mxu0 0
        %1115 = vmatpush1.bf16.msra.mxu0 0
        %1116 = vmatprep.subr.bf16.mxu0 0
        %1117 = vmatpush1.bf16.msra.mxu0 0
        %1118 = vmatprep.subr.bf16.mxu0 0
        %1119 = vmatpush1.bf16.msra.mxu0 0
        %1120 = vmatprep.mubr.bf16.mxu0 0
        %1121 = vmatmul.mubr.bf16.gmra.mrb[0].mxu0 %v1038
        %v1122 = vpop.f32.mrb[0].mxu0
        %v1123 = vadd.f32 0.0, %v1122
        %v1124 = vpop.f32.mrb[0].mxu0
        %v1125 = vpop.f32.mrb[0].mxu0
        %v1126 = vadd.f32 0.0, %v1125
        %v1127 = vpop.f32.mrb[0].mxu0
        %1128 = vmatprep.mubr.bf16.mxu0 0
        %1129 = vmatmul.mubr.bf16.gmra.mrb[0].mxu0 %v1041
        %v1130 = vpop.f32.mrb[0].mxu0
        %v1131 = vadd.f32 0.0, %v1130
        %v1132 = vpop.f32.mrb[0].mxu0
        %v1133 = vpop.f32.mrb[0].mxu0
        %v1134 = vadd.f32 0.0, %v1133
        %v1135 = vpop.f32.mrb[0].mxu0
        %1136 = vmatprep.mubr.bf16.mxu0 0
        %1137 = vmatmul.mubr.bf16.gmra.mrb[0].mxu0 %v1044
        %v1138 = vpop.f32.mrb[0].mxu0
        %v1139 = vadd.f32 0.0, %v1138
        %v1140 = vpop.f32.mrb[0].mxu0
        %v1141 = vpop.f32.mrb[0].mxu0
        %v1142 = vadd.f32 0.0, %v1141
        %v1143 = vpop.f32.mrb[0].mxu0
        %1144 = vmatprep.mubr.bf16.mxu0 0
        %1145 = vmatmul.mubr.bf16.gmra.mrb[0].mxu0 %v1047
        %v1146 = vpop.f32.mrb[0].mxu0
        %v1147 = vadd.f32 0.0, %v1146
        %v1148 = vpop.f32.mrb[0].mxu0
        %v1149 = vpop.f32.mrb[0].mxu0
        %v1150 = vadd.f32 0.0, %v1149
        %v1151 = vpop.f32.mrb[0].mxu0
        %1152 = vmatprep.mubr.bf16.mxu0 0
        %1153 = vmatmul.mubr.bf16.gmra.mrb[0].mxu0 %v1050
        %v1154 = vpop.f32.mrb[0].mxu0
        %v1155 = vadd.f32 0.0, %v1154
        %v1156 = vpop.f32.mrb[0].mxu0
        %v1157 = vpop.f32.mrb[0].mxu0
        %v1158 = vadd.f32 0.0, %v1157
        %v1159 = vpop.f32.mrb[0].mxu0
        %1160 = vmatprep.mubr.bf16.mxu0 0
        %1161 = vmatmul.mubr.bf16.gmra.mrb[0].mxu0 %v1053
        %v1162 = vpop.f32.mrb[0].mxu0
        %v1163 = vadd.f32 0.0, %v1162
        %v1164 = vpop.f32.mrb[0].mxu0
        %v1165 = vpop.f32.mrb[0].mxu0
        %v1166 = vadd.f32 0.0, %v1165
        %v1167 = vpop.f32.mrb[0].mxu0
        %1168 = vmatprep.mubr.bf16.mxu0 0
        %1169 = vmatmul.mubr.bf16.gmra.mrb[0].mxu0 %v1056
        %v1170 = vpop.f32.mrb[0].mxu0
        %v1171 = vadd.f32 0.0, %v1170
        %v1172 = vpop.f32.mrb[0].mxu0
        %v1173 = vpop.f32.mrb[0].mxu0
        %v1174 = vadd.f32 0.0, %v1173
        %v1175 = vpop.f32.mrb[0].mxu0
        %1176 = vmatprep.mubr.bf16.mxu0 0
        %1177 = vmatmul.mubr.bf16.gmra.mrb[0].mxu0 %v1059
        %v1178 = vpop.f32.mrb[0].mxu0
        %v1179 = vadd.f32 0.0, %v1178
        %v1180 = vpop.f32.mrb[0].mxu0
        %v1181 = vpop.f32.mrb[0].mxu0
        %v1182 = vadd.f32 0.0, %v1181
        %v1183 = vpop.f32.mrb[0].mxu0
        %1184 = vmatprep.mubr.bf16.mxu0 0
        %1185 = vmatmul.mubr.bf16.gmra.mrb[0].mxu0 %v1062
        %v1186 = vpop.f32.mrb[0].mxu0
        %v1187 = vadd.f32 0.0, %v1186
        %v1188 = vpop.f32.mrb[0].mxu0
        %v1189 = vpop.f32.mrb[0].mxu0
        %v1190 = vadd.f32 0.0, %v1189
        %v1191 = vpop.f32.mrb[0].mxu0
        %1192 = vmatprep.mubr.bf16.mxu0 0
        %1193 = vmatmul.mubr.bf16.gmra.mrb[0].mxu0 %v1065
        %v1194 = vpop.f32.mrb[0].mxu0
        %v1195 = vadd.f32 0.0, %v1194
        %v1196 = vpop.f32.mrb[0].mxu0
        %v1197 = vpop.f32.mrb[0].mxu0
        %v1198 = vadd.f32 0.0, %v1197
        %v1199 = vpop.f32.mrb[0].mxu0
        %1200 = vmatprep.mubr.bf16.mxu0 0
        %1201 = vmatmul.mubr.bf16.gmra.mrb[0].mxu0 %v1068
        %v1202 = vpop.f32.mrb[0].mxu0
        %v1203 = vadd.f32 0.0, %v1202
        %v1204 = vpop.f32.mrb[0].mxu0
        %v1205 = vpop.f32.mrb[0].mxu0
        %v1206 = vadd.f32 0.0, %v1205
        %v1207 = vpop.f32.mrb[0].mxu0
        %1208 = vmatprep.mubr.bf16.mxu0 0
        %1209 = vmatmul.mubr.bf16.gmra.mrb[0].mxu0 %v1071
        %v1210 = vpop.f32.mrb[0].mxu0
        %v1211 = vadd.f32 0.0, %v1210
        %v1212 = vpop.f32.mrb[0].mxu0
        %v1213 = vpop.f32.mrb[0].mxu0
        %v1214 = vadd.f32 0.0, %v1213
        %v1215 = vpop.f32.mrb[0].mxu0
        %1216 = vmatprep.mubr.bf16.mxu0 0
        %1217 = vmatmul.mubr.bf16.gmra.mrb[0].mxu0 %v1074
        %v1218 = vpop.f32.mrb[0].mxu0
        %v1219 = vadd.f32 0.0, %v1218
        %v1220 = vpop.f32.mrb[0].mxu0
        %v1221 = vpop.f32.mrb[0].mxu0
        %v1222 = vadd.f32 0.0, %v1221
        %v1223 = vpop.f32.mrb[0].mxu0
        %1224 = vmatprep.mubr.bf16.mxu0 0
        %1225 = vmatmul.mubr.bf16.gmra.mrb[0].mxu0 %v1077
        %v1226 = vpop.f32.mrb[0].mxu0
        %v1227 = vadd.f32 0.0, %v1226
        %v1228 = vpop.f32.mrb[0].mxu0
        %v1229 = vpop.f32.mrb[0].mxu0
        %v1230 = vadd.f32 0.0, %v1229
        %v1231 = vpop.f32.mrb[0].mxu0
        %1232 = vmatprep.mubr.bf16.mxu0 0
        %1233 = vmatmul.mubr.bf16.gmra.mrb[0].mxu0 %v1080
        %v1234 = vpop.f32.mrb[0].mxu0
        %v1235 = vadd.f32 0.0, %v1234
        %v1236 = vpop.f32.mrb[0].mxu0
        %v1237 = vpop.f32.mrb[0].mxu0
        %v1238 = vadd.f32 0.0, %v1237
        %v1239 = vpop.f32.mrb[0].mxu0
        %1240 = vmatprep.mubr.bf16.mxu0 0
        %1241 = vmatmul.mubr.bf16.gmra.mrb[0].mxu0 %v1083
        %v1242 = vpop.f32.mrb[0].mxu0
        %v1243 = vadd.f32 0.0, %v1242
        %v1244 = vpop.f32.mrb[0].mxu0
        %v1245 = vpop.f32.mrb[0].mxu0
        %v1246 = vadd.f32 0.0, %v1245
        %v1247 = vpop.f32.mrb[0].mxu0
        %1248 = vdwg.mxu0
        %v1249 = vadd.f32 %v790, %v1123
        %v1250 = vadd.f32 %v793, %v1126
        %v1251 = vadd.f32 %v798, %v1131
        %v1252 = vadd.f32 %v801, %v1134
        %v1253 = vadd.f32 %v806, %v1139
        %v1254 = vadd.f32 %v809, %v1142
        %v1255 = vadd.f32 %v814, %v1147
        %v1256 = vadd.f32 %v817, %v1150
        %v1257 = vadd.f32 %v822, %v1155
        %v1258 = vadd.f32 %v825, %v1158
        %v1259 = vadd.f32 %v830, %v1163
        %v1260 = vadd.f32 %v833, %v1166
        %v1261 = vadd.f32 %v838, %v1171
        %v1262 = vadd.f32 %v841, %v1174
        %v1263 = vadd.f32 %v846, %v1179
        %v1264 = vadd.f32 %v849, %v1182
        %v1265 = vadd.f32 %v854, %v1187
        %v1266 = vadd.f32 %v857, %v1190
        %v1267 = vadd.f32 %v862, %v1195
        %v1268 = vadd.f32 %v865, %v1198
        %v1269 = vadd.f32 %v870, %v1203
        %v1270 = vadd.f32 %v873, %v1206
        %v1271 = vadd.f32 %v878, %v1211
        %v1272 = vadd.f32 %v881, %v1214
        %v1273 = vadd.f32 %v886, %v1219
        %v1274 = vadd.f32 %v889, %v1222
        %v1275 = vadd.f32 %v894, %v1227
        %v1276 = vadd.f32 %v897, %v1230
        %v1277 = vadd.f32 %v902, %v1235
        %v1278 = vadd.f32 %v905, %v1238
        %v1279 = vadd.f32 %v910, %v1243
        %v1280 = vadd.f32 %v913, %v1246
        %v1281 = vpack.c.bf16 %v1250, %v1249
        %v1282 = vpack.c.bf16 %v1252, %v1251
        %v1283 = vpack.c.bf16 %v1254, %v1253
        %v1284 = vpack.c.bf16 %v1256, %v1255
        %v1285 = vpack.c.bf16 %v1258, %v1257
        %v1286 = vpack.c.bf16 %v1260, %v1259
        %v1287 = vpack.c.bf16 %v1262, %v1261
        %v1288 = vpack.c.bf16 %v1264, %v1263
        %v1289 = vpack.c.bf16 %v1266, %v1265
        %v1290 = vpack.c.bf16 %v1268, %v1267
        %v1291 = vpack.c.bf16 %v1270, %v1269
        %v1292 = vpack.c.bf16 %v1272, %v1271
        %v1293 = vpack.c.bf16 %v1274, %v1273
        %v1294 = vpack.c.bf16 %v1276, %v1275
        %v1295 = vpack.c.bf16 %v1278, %v1277
        %v1296 = vpack.c.bf16 %v1280, %v1279
        %v1313 = vunpack.c.l.b16 %v1281
        %v1314 = vunpack.c.h.b16 %v1281
        %v1315 = vunpack.c.l.b16 %v1282
        %v1316 = vunpack.c.h.b16 %v1282
        %v1317 = vunpack.c.l.b16 %v1283
        %v1318 = vunpack.c.h.b16 %v1283
        %v1319 = vunpack.c.l.b16 %v1284
        %v1320 = vunpack.c.h.b16 %v1284
        %v1321 = vunpack.c.l.b16 %v1285
        %v1322 = vunpack.c.h.b16 %v1285
        %v1323 = vunpack.c.l.b16 %v1286
        %v1324 = vunpack.c.h.b16 %v1286
        %v1325 = vunpack.c.l.b16 %v1287
        %v1326 = vunpack.c.h.b16 %v1287
        %v1327 = vunpack.c.l.b16 %v1288
        %v1328 = vunpack.c.h.b16 %v1288
        %v1329 = vunpack.c.l.b16 %v1289
        %v1330 = vunpack.c.h.b16 %v1289
        %v1331 = vunpack.c.l.b16 %v1290
        %v1332 = vunpack.c.h.b16 %v1290
        %v1333 = vunpack.c.l.b16 %v1291
        %v1334 = vunpack.c.h.b16 %v1291
        %v1335 = vunpack.c.l.b16 %v1292
        %v1336 = vunpack.c.h.b16 %v1292
        %v1337 = vunpack.c.l.b16 %v1293
        %v1338 = vunpack.c.h.b16 %v1293
        %v1339 = vunpack.c.l.b16 %v1294
        %v1340 = vunpack.c.h.b16 %v1294
        %v1341 = vunpack.c.l.b16 %v1295
        %v1342 = vunpack.c.h.b16 %v1295
        %v1343 = vunpack.c.l.b16 %v1296
        %v1344 = vunpack.c.h.b16 %v1296
        %v1345 = vpack.c.b16 %v1313, %v1313
        %v1346 = vpack.c.b16 %v1314, %v1314
        %v1347 = vpack.c.b16 %v1315, %v1315
        %v1348 = vpack.c.b16 %v1316, %v1316
        %v1349 = vpack.c.b16 %v1317, %v1317
        %v1350 = vpack.c.b16 %v1318, %v1318
        %v1351 = vpack.c.b16 %v1319, %v1319
        %v1352 = vpack.c.b16 %v1320, %v1320
        %v1353 = vpack.c.b16 %v1321, %v1321
        %v1354 = vpack.c.b16 %v1322, %v1322
        %v1355 = vpack.c.b16 %v1323, %v1323
        %v1356 = vpack.c.b16 %v1324, %v1324
        %v1357 = vpack.c.b16 %v1325, %v1325
        %v1358 = vpack.c.b16 %v1326, %v1326
        %v1359 = vpack.c.b16 %v1327, %v1327
        %v1360 = vpack.c.b16 %v1328, %v1328
        %v1361 = vpack.c.b16 %v1329, %v1329
        %v1362 = vpack.c.b16 %v1330, %v1330
        %v1363 = vpack.c.b16 %v1331, %v1331
        %v1364 = vpack.c.b16 %v1332, %v1332
        %v1365 = vpack.c.b16 %v1333, %v1333
        %v1366 = vpack.c.b16 %v1334, %v1334
        %v1367 = vpack.c.b16 %v1335, %v1335
        %v1368 = vpack.c.b16 %v1336, %v1336
        %v1369 = vpack.c.b16 %v1337, %v1337
        %v1370 = vpack.c.b16 %v1338, %v1338
        %v1371 = vpack.c.b16 %v1339, %v1339
        %v1372 = vpack.c.b16 %v1340, %v1340
        %v1373 = vpack.c.b16 %v1341, %v1341
        %v1374 = vpack.c.b16 %v1342, %v1342
        %v1375 = vpack.c.b16 %v1343, %v1343
        %v1376 = vpack.c.b16 %v1344, %v1344
        %1409 = vst [vmem:[%s234] sm:$0xf] %v1345
        %1410 = vst [vmem:[%s234 + $0x4] sm:$0xf] %v1346
        %1411 = vst [vmem:[%s234 + $0x8] sm:$0xf] %v1347
        %1412 = vst [vmem:[%s234 + $0xc] sm:$0xf] %v1348
        %1413 = vst [vmem:[%s234 + $0x10] sm:$0xf] %v1349
        %1414 = vst [vmem:[%s234 + $0x14] sm:$0xf] %v1350
        %1415 = vst [vmem:[%s234 + $0x18] sm:$0xf] %v1351
        %1416 = vst [vmem:[%s234 + $0x1c] sm:$0xf] %v1352
        %1417 = vst [vmem:[%s234 + $0x20] sm:$0xf] %v1353
        %1418 = vst [vmem:[%s234 + $0x24] sm:$0xf] %v1354
        %1419 = vst [vmem:[%s234 + $0x28] sm:$0xf] %v1355
        %1420 = vst [vmem:[%s234 + $0x2c] sm:$0xf] %v1356
        %1421 = vst [vmem:[%s234 + $0x30] sm:$0xf] %v1357
        %1422 = vst [vmem:[%s234 + $0x34] sm:$0xf] %v1358
        %1423 = vst [vmem:[%s234 + $0x38] sm:$0xf] %v1359
        %1424 = vst [vmem:[%s234 + $0x3c] sm:$0xf] %v1360
        %1425 = vst [vmem:[%s234 + $0x40] sm:$0xf] %v1361
        %1426 = vst [vmem:[%s234 + $0x44] sm:$0xf] %v1362
        %1427 = vst [vmem:[%s234 + $0x48] sm:$0xf] %v1363
        %1428 = vst [vmem:[%s234 + $0x4c] sm:$0xf] %v1364
        %1429 = vst [vmem:[%s234 + $0x50] sm:$0xf] %v1365
        %1430 = vst [vmem:[%s234 + $0x54] sm:$0xf] %v1366
        %1431 = vst [vmem:[%s234 + $0x58] sm:$0xf] %v1367
        %1432 = vst [vmem:[%s234 + $0x5c] sm:$0xf] %v1368
        %1433 = vst [vmem:[%s234 + $0x60] sm:$0xf] %v1369
        %1434 = vst [vmem:[%s234 + $0x64] sm:$0xf] %v1370
        %1435 = vst [vmem:[%s234 + $0x68] sm:$0xf] %v1371
        %1436 = vst [vmem:[%s234 + $0x6c] sm:$0xf] %v1372
        %1437 = vst [vmem:[%s234 + $0x70] sm:$0xf] %v1373
        %1438 = vst [vmem:[%s234 + $0x74] sm:$0xf] %v1374
        %1439 = vst [vmem:[%s234 + $0x78] sm:$0xf] %v1375
        %1440 = vst [vmem:[%s234 + $0x7c] sm:$0xf] %v1376
        %v1441 = vadd.f32 %v1249, %v1250
        %v1442 = vadd.f32 %v1441, %v1251
        %v1443 = vadd.f32 %v1442, %v1252
        %v1444 = vadd.f32 %v1443, %v1253
        %v1445 = vadd.f32 %v1444, %v1254
        %v1446 = vadd.f32 %v1445, %v1255
        %v1447 = vadd.f32 %v1446, %v1256
        %v1448 = vadd.f32 %v1447, %v1257
        %v1449 = vadd.f32 %v1448, %v1258
        %v1450 = vadd.f32 %v1449, %v1259
        %v1451 = vadd.f32 %v1450, %v1260
        %v1452 = vadd.f32 %v1451, %v1261
        %v1453 = vadd.f32 %v1452, %v1262
        %v1454 = vadd.f32 %v1453, %v1263
        %v1455 = vadd.f32 %v1454, %v1264
        %v1456 = vadd.f32 %v1455, %v1265
        %v1457 = vadd.f32 %v1456, %v1266
        %v1458 = vadd.f32 %v1457, %v1267
        %v1459 = vadd.f32 %v1458, %v1268
        %v1460 = vadd.f32 %v1459, %v1269
        %v1461 = vadd.f32 %v1460, %v1270
        %v1462 = vadd.f32 %v1461, %v1271
        %v1463 = vadd.f32 %v1462, %v1272
        %v1464 = vadd.f32 %v1463, %v1273
        %v1465 = vadd.f32 %v1464, %v1274
        %v1466 = vadd.f32 %v1465, %v1275
        %v1467 = vadd.f32 %v1466, %v1276
        %v1468 = vadd.f32 %v1467, %v1277
        %v1469 = vadd.f32 %v1468, %v1278
        %v1470 = vadd.f32 %v1469, %v1279
        %v1471 = vadd.f32 %v1470, %v1280
        %v1472 = vrot.slane %v1471, 4
        %v1473 = vadd.f32 %v1471, %v1472
        %v1474 = vrot.slane %v1473, 2
        %v1475 = vadd.f32 %v1473, %v1474
        %v1476 = vrot.slane %v1475, 1
        %v1477 = vadd.f32 %v1475, %v1476
        %v1478 = vmul.f32 %v1249, %v1249
        %v1479 = vmul.f32 %v1250, %v1250
        %v1480 = vmul.f32 %v1251, %v1251
        %v1481 = vmul.f32 %v1252, %v1252
        %v1482 = vmul.f32 %v1253, %v1253
        %v1483 = vmul.f32 %v1254, %v1254
        %v1484 = vmul.f32 %v1255, %v1255
        %v1485 = vmul.f32 %v1256, %v1256
        %v1486 = vmul.f32 %v1257, %v1257
        %v1487 = vmul.f32 %v1258, %v1258
        %v1488 = vmul.f32 %v1259, %v1259
        %v1489 = vmul.f32 %v1260, %v1260
        %v1490 = vmul.f32 %v1261, %v1261
        %v1491 = vmul.f32 %v1262, %v1262
        %v1492 = vmul.f32 %v1263, %v1263
        %v1493 = vmul.f32 %v1264, %v1264
        %v1494 = vmul.f32 %v1265, %v1265
        %v1495 = vmul.f32 %v1266, %v1266
        %v1496 = vmul.f32 %v1267, %v1267
        %v1497 = vmul.f32 %v1268, %v1268
        %v1498 = vmul.f32 %v1269, %v1269
        %v1499 = vmul.f32 %v1270, %v1270
        %v1500 = vmul.f32 %v1271, %v1271
        %v1501 = vmul.f32 %v1272, %v1272
        %v1502 = vmul.f32 %v1273, %v1273
        %v1503 = vmul.f32 %v1274, %v1274
        %v1504 = vmul.f32 %v1275, %v1275
        %v1505 = vmul.f32 %v1276, %v1276
        %v1506 = vmul.f32 %v1277, %v1277
        %v1507 = vmul.f32 %v1278, %v1278
        %v1508 = vmul.f32 %v1279, %v1279
        %v1509 = vmul.f32 %v1280, %v1280
        %v1510 = vadd.f32 %v1478, %v1479
        %v1511 = vadd.f32 %v1510, %v1480
        %v1512 = vadd.f32 %v1511, %v1481
        %v1513 = vadd.f32 %v1512, %v1482
        %v1514 = vadd.f32 %v1513, %v1483
        %v1515 = vadd.f32 %v1514, %v1484
        %v1516 = vadd.f32 %v1515, %v1485
        %v1517 = vadd.f32 %v1516, %v1486
        %v1518 = vadd.f32 %v1517, %v1487
        %v1519 = vadd.f32 %v1518, %v1488
        %v1520 = vadd.f32 %v1519, %v1489
        %v1521 = vadd.f32 %v1520, %v1490
        %v1522 = vadd.f32 %v1521, %v1491
        %v1523 = vadd.f32 %v1522, %v1492
        %v1524 = vadd.f32 %v1523, %v1493
        %v1525 = vadd.f32 %v1524, %v1494
        %v1526 = vadd.f32 %v1525, %v1495
        %v1527 = vadd.f32 %v1526, %v1496
        %v1528 = vadd.f32 %v1527, %v1497
        %v1529 = vadd.f32 %v1528, %v1498
        %v1530 = vadd.f32 %v1529, %v1499
        %v1531 = vadd.f32 %v1530, %v1500
        %v1532 = vadd.f32 %v1531, %v1501
        %v1533 = vadd.f32 %v1532, %v1502
        %v1534 = vadd.f32 %v1533, %v1503
        %v1535 = vadd.f32 %v1534, %v1504
        %v1536 = vadd.f32 %v1535, %v1505
        %v1537 = vadd.f32 %v1536, %v1506
        %v1538 = vadd.f32 %v1537, %v1507
        %v1539 = vadd.f32 %v1538, %v1508
        %v1540 = vadd.f32 %v1539, %v1509
        %v1541 = vrot.slane %v1540, 4
        %v1542 = vadd.f32 %v1540, %v1541
        %v1543 = vrot.slane %v1542, 2
        %v1544 = vadd.f32 %v1542, %v1543
        %v1545 = vrot.slane %v1544, 1
        %v1546 = vadd.f32 %v1544, %v1545
        %1547 = vst [vmem:[%s241] sm:$0xff] %v1477
        %1548 = vst [vmem:[%s248] sm:$0xff] %v1546
        %s1549 = sand.u32 %s81, 1
        %s1550 = scalar_lea.sflag [#allocation4], %s1549
        %s1551 = sand.u32 %s81, 1
        %s1552 = smul.addr %s1551, 128
        %s1553 = scalar_lea.vmem [#allocation7], %s1552
        %s1554 = sand.u32 %s26, 1
        %s1555 = scalar_lea.sflag [#allocation9], %s1554
        %s1556 = sand.u32 %s107, 1
        %s1557 = smul.addr %s1556, 8
        %s1558 = scalar_lea.vmem [#allocation8], %s1557
        %s1559 = sand.u32 %s26, 1
        %s1560 = scalar_lea.sflag [#allocation9], %s1559
        %s1561 = sand.u32 %s133, 1
        %s1562 = smul.addr %s1561, 8
        %s1563 = scalar_lea.vmem [#allocation10], %s1562
        // Predicated region
        $region37: #{basic_conv2d.2} parent=27 // pred_check
          %p1564 = pneg %p91
        $region38: #{basic_conv2d.2} parent=27 // pred_check_branch
          %1566 = sbr.rel (%p1564) target = $region40
        $region39: #{basic_conv2d.2} parent=27 // pred_region
          %s1568 = ssub.s32 2048, 2048
          %1569 = vsyncadd %s1550, %s1568
          %s1570 = smul.addr %s26, 32
          %s1571 = smul.addr %s1570, 64
          %s1572 = scalar_lea.hbm %s2, %s1571
          %s1573 = sshll.u32 %s1553, 4
          %s1574 = int_to_ptr.vmem [resolvable:$true] %s1573
          %1579 = dma.vmem_to_hbm [thread:$0]  %s1574, 2048, %s1572, %s1550, 64, 64, 4
        $region40: #{basic_conv2d.2} parent=27 // pred_fallthru
          _
        // Predicated region
        $region41: #{basic_conv2d.2} parent=27 // pred_check
          %p1580 = pneg %p117
        $region42: #{basic_conv2d.2} parent=27 // pred_check_branch
          %1582 = sbr.rel (%p1580) target = $region44
        $region43: #{basic_conv2d.2} parent=27 // pred_region
          %s1584 = ssub.s32 128, 128
          %1585 = vsyncadd %s1555, %s1584
          %s1586 = smul.addr %s26, 128
          %s1587 = scalar_lea.hbm %s3, %s1586
          %s1589 = sshll.u32 %s1558, 4
          %s1590 = int_to_ptr.vmem [resolvable:$true] %s1589
          %1592 = dma.vmem_to_hbm [thread:$0]  %s1590, 128, %s1587, %s1555
        $region44: #{basic_conv2d.2} parent=27 // pred_fallthru
          _
        // Predicated region
        $region45: #{basic_conv2d.2} parent=27 // pred_check
          %p1593 = pneg %p143
        $region46: #{basic_conv2d.2} parent=27 // pred_check_branch
          %1595 = sbr.rel (%p1593) target = $region48
        $region47: #{basic_conv2d.2} parent=27 // pred_region
          %s1597 = ssub.s32 128, 128
          %1598 = vsyncadd %s1560, %s1597
          %s1599 = smul.addr %s26, 128
          %s1600 = scalar_lea.hbm %s4, %s1599
          %s1602 = sshll.u32 %s1563, 4
          %s1603 = int_to_ptr.vmem [resolvable:$true] %s1602
          %1605 = dma.vmem_to_hbm [thread:$0]  %s1603, 128, %s1600, %s1560
        $region48: #{basic_conv2d.2} parent=27 // pred_fallthru
          _
      $region28: #{basic_conv2d.2} parent=5 // pred_fallthru
        _
      %p1606 = scmp.le.s32.totalorder 2, %s21
      // Predicated region
      $region49: #{basic_conv2d.2} parent=5 // pred_check
        %p1607 = pneg %p1606
      $region50: #{basic_conv2d.2} parent=5 // pred_check_branch
        %1609 = sbr.rel (%p1607) target = $region52
      $region51: #{basic_conv2d.2} parent=5 // pred_region
        %s1610 = ssub.s32 %s21, 2
        // Predicated region
        $region53: #{basic_conv2d.2} parent=51 // pred_check
          %p1611 = pneg %p97
        $region54: #{basic_conv2d.2} parent=51 // pred_check_branch
          %1613 = sbr.rel (%p1611) target = $region56
        $region55: #{basic_conv2d.2} parent=51 // pred_region
          %s1614 = sand.u32 %s82, 1
          %s1615 = scalar_lea.sflag [#allocation4], %s1614
          %s1616 = sand.u32 %s82, 1
          %s1617 = smul.addr %s1616, 128
          %s1618 = scalar_lea.vmem [#allocation7], %s1617
          %1619 = dma.done %s1615, 2048
        $region56: #{basic_conv2d.2} parent=51 // pred_fallthru
          _
        // Predicated region
        $region57: #{basic_conv2d.2} parent=51 // pred_check
          %p1620 = pneg %p123
        $region58: #{basic_conv2d.2} parent=51 // pred_check_branch
          %1622 = sbr.rel (%p1620) target = $region60
        $region59: #{basic_conv2d.2} parent=51 // pred_region
          %s1623 = sand.u32 %s27, 1
          %s1624 = scalar_lea.sflag [#allocation9], %s1623
          %s1625 = sand.u32 %s108, 1
          %s1626 = smul.addr %s1625, 8
          %s1627 = scalar_lea.vmem [#allocation8], %s1626
          %1628 = dma.done %s1624, 128
        $region60: #{basic_conv2d.2} parent=51 // pred_fallthru
          _
        // Predicated region
        $region61: #{basic_conv2d.2} parent=51 // pred_check
          %p1629 = pneg %p149
        $region62: #{basic_conv2d.2} parent=51 // pred_check_branch
          %1631 = sbr.rel (%p1629) target = $region64
        $region63: #{basic_conv2d.2} parent=51 // pred_region
          %s1632 = sand.u32 %s27, 1
          %s1633 = scalar_lea.sflag [#allocation9], %s1632
          %s1634 = sand.u32 %s134, 1
          %s1635 = smul.addr %s1634, 8
          %s1636 = scalar_lea.vmem [#allocation10], %s1635
          %1637 = dma.done %s1633, 128
        $region64: #{basic_conv2d.2} parent=51 // pred_fallthru
          _
      $region52: #{basic_conv2d.2} parent=5 // pred_fallthru
        _
    $region6: #{basic_conv2d.2} parent=1 // loop_footer
      %s25 = sadd.s32 1, %s21
    $region7: #{basic_conv2d.2} parent=1 // loop_footer_branch
      %20 = sbr.rel target = $region3
    $region8: #{basic_conv2d.2} parent=1 // loop_exit
      _
    %1638 = vsyncpa [#allocation3], 1
    %s1639 = scalar_lea.sflag [#allocation3], 1
    %1640 = vsyncpa %s1639, 1
    %1641 = vsyncpa [#allocation6], 1
    %1642 = vsyncpa [#allocation4], 1
    %s1643 = scalar_lea.sflag [#allocation4], 1
    %1644 = vsyncpa %s1643, 1
    %1645 = vsyncpa [#allocation9], 1
    %s1646 = scalar_lea.sflag [#allocation9], 1
    %1647 = vsyncpa %s1646, 1

</llo_original>
